<compile_context>
chip_gen: v7x
topology: tpu7x:2x2x1
jax: 0.10.0
libtpu: 0.0.40
codegen_flags: <defaults>
</compile_context>

<pallas_src>
import math

import jax
import jax.numpy as jnp
from jax import lax
from jax.experimental import pallas as pl
from jax.experimental.pallas import tpu as pltpu

LANE = 128
VMEM_LIMIT_BYTES = 32 * 1024 * 1024   # explicit; safe on v5e/v6e (128 MiB) and v7x (64 MiB)


def _round_up(c, m=LANE):
    return -(-c // m) * m


def _round_up8(c):
    return -(-c // 8) * 8


# ----------------------------------------------------------------------------
# Pallas kernels
# ----------------------------------------------------------------------------
def _sa_mlp_max_kernel(g_ref,
                       w1_ref, b1_ref,
                       w2_ref, b2_ref,
                       w3_ref, b3_ref,
                       o_ref):
    """Shared MLP (3x [1x1 conv with BN pre-folded + ReLU]) + max over nsample.

    g_ref: (TG, nsample, C_in) bf16 block; o_ref: (TG, C_out_padded) bf16 block.
    Dots are bf16 x bf16 with fp32 MXU accumulation.
    """
    tg, ns, cin = g_ref.shape
    x = g_ref[...].reshape(tg * ns, cin)                 # layout no-op: ns % 8 == 0

    h = jnp.maximum(
        jnp.dot(x, w1_ref[...], preferred_element_type=jnp.float32) + b1_ref[...], 0.0)
    h = jnp.maximum(
        jnp.dot(h.astype(jnp.bfloat16), w2_ref[...],
                preferred_element_type=jnp.float32) + b2_ref[...], 0.0)
    h = jnp.maximum(
        jnp.dot(h.astype(jnp.bfloat16), w3_ref[...],
                preferred_element_type=jnp.float32) + b3_ref[...], 0.0)

    # max over nsample: XLU sublane reduce; keep axis=1 form.
    o_ref[...] = jnp.max(h.reshape(tg, ns, h.shape[-1]), axis=1).astype(o_ref.dtype)


def _sa3_backend_kernel(g_ref,
                        w1_ref, b1_ref,
                        w2_ref, b2_ref,
                        w3_ref, b3_ref,
                        fb1_ref, fb2_ref, fb3_ref,
                        fw1_hbm, fw2_hbm, fw3_hbm,
                        o_ref,
                        fw1_v, fw2_v, fw3_v, dma_sems):
    """Fused SA3 (group_all MLP + max over all points) and the task backend.

    g_ref: (Bt, N, C_in) bf16;  o_ref: (Bt, num_classes_padded) f32.
    The fc weights live in HBM (memory_space=pl.ANY); their DMA into VMEM
    scratch is issued here at kernel entry and waited right before each fc dot,
    so the weight fetch overlaps the SA3 MLP matmuls.
    """
    # Start the fc-weight DMAs immediately (overlap with SA3 compute below).
    cp1 = pltpu.make_async_copy(fw1_hbm, fw1_v, dma_sems.at[0])
    cp2 = pltpu.make_async_copy(fw2_hbm, fw2_v, dma_sems.at[1])
    cp3 = pltpu.make_async_copy(fw3_hbm, fw3_v, dma_sems.at[2])
    cp1.start(); cp2.start(); cp3.start()

    b, ns, cin = g_ref.shape
    x = g_ref[...].reshape(b * ns, cin)

    h = jnp.maximum(
        jnp.dot(x, w1_ref[...], preferred_element_type=jnp.float32) + b1_ref[...], 0.0)
    h = jnp.maximum(
        jnp.dot(h.astype(jnp.bfloat16), w2_ref[...],
                preferred_element_type=jnp.float32) + b2_ref[...], 0.0)
    h = jnp.maximum(
        jnp.dot(h.astype(jnp.bfloat16), w3_ref[...],
                preferred_element_type=jnp.float32) + b3_ref[...], 0.0)

    feat = jnp.max(h.reshape(b, ns, h.shape[-1]), axis=1)          # [Bt, D3_p], f32

    # TODO(synk): Dropout(0.4) layers are identity in eval mode; training-mode
    # stochastic dropout is not implemented here.
    cp1.wait()
    h = jnp.maximum(
        jnp.dot(feat.astype(jnp.bfloat16), fw1_v[...],
                preferred_element_type=jnp.float32) + fb1_ref[...], 0.0)
    cp2.wait()
    h = jnp.maximum(
        jnp.dot(h.astype(jnp.bfloat16), fw2_v[...],
                preferred_element_type=jnp.float32) + fb2_ref[...], 0.0)
    cp3.wait()
    o_ref[...] = jnp.dot(h.astype(jnp.bfloat16), fw3_v[...],
                         preferred_element_type=jnp.float32) + fb3_ref[...]


# ----------------------------------------------------------------------------
# Tiling / Pallas wrappers
# ----------------------------------------------------------------------------
def _choose_tg(G, nsample, cin, cmax, *, in_itemsize=2, target_bytes=4 << 20):
    """Pick the group-tile size from a VMEM byte budget (not core count).

    Budget counts one input block plus the widest f32 intermediate; ~4 MiB per
    block keeps total VMEM (with double-buffered inputs) well under the 32 MiB
    scoped limit on every chip generation, and yields >=8 pipelined grid steps
    at realistic PointNet++ sizes while tiny problems collapse to one step.
    Returned tg divides G and is a multiple of 8 (or equals G).
    """
    if G <= 8 or G % 8 != 0:
        return G
    per_group = max(1, nsample * (cin * in_itemsize + cmax * 4))
    tg = max(8, min(G, (target_bytes // per_group) // 8 * 8))
    while tg > 8 and G % tg != 0:
        tg -= 8
    return tg if G % tg == 0 else G


def sa_mlp_max(grouped, layers):
    """grouped: [G, nsample, C_in] bf16 -> [G, C_out_padded] bf16."""
    G, Sn, Cin = grouped.shape
    Cout = layers[-1]['w'].shape[1]
    cmax = max(l['w'].shape[1] for l in layers)

    tg = _choose_tg(G, Sn, Cin, cmax)
    nblk = G // tg

    args = []
    in_specs = [pl.BlockSpec((tg, Sn, Cin), lambda i: (i, 0, 0))]
    for lyr in layers:
        args += [lyr['w'], lyr['b']]
        in_specs += [pl.BlockSpec(lyr['w'].shape, lambda i: (0, 0)),
                     pl.BlockSpec(lyr['b'].shape, lambda i: (0, 0))]

    fn = pl.pallas_call(
        _sa_mlp_max_kernel,
        out_shape=jax.ShapeDtypeStruct((G, Cout), jnp.bfloat16),
        grid=(nblk,),
        in_specs=in_specs,
        out_specs=pl.BlockSpec((tg, Cout), lambda i: (i, 0)),
        compiler_params=pltpu.CompilerParams(
            dimension_semantics=("parallel",),
            vmem_limit_bytes=VMEM_LIMIT_BYTES),
    )
    return fn(grouped, *args)


def sa3_backend_call(grouped, sa3_layers, fc_layers):
    """grouped: [B, N, C_in] bf16 -> padded logits [B, num_classes_padded] f32."""
    B, Nn, Cin = grouped.shape
    ncls_p = fc_layers[-1]['w'].shape[1]

    # 2-way batch split ("parallel") so v7x's second TensorCore gets work.
    # Only when the half-batch block stays sublane-aligned (bt % 8 == 0);
    # at tiny batches it stays a single step (the single-TC optimum anyway).
    nblk = 2 if (B % 16 == 0) else 1
    bt = B // nblk

    args = []
    in_specs = [pl.BlockSpec((bt, Nn, Cin), lambda i: (i, 0, 0))]
    for lyr in sa3_layers:
        args += [lyr['w'], lyr['b']]
        in_specs += [pl.BlockSpec(lyr['w'].shape, lambda i: (0, 0)),
                     pl.BlockSpec(lyr['b'].shape, lambda i: (0, 0))]
    for lyr in fc_layers:                       # small f32 biases: normal VMEM inputs
        args.append(lyr['b'])
        in_specs.append(pl.BlockSpec(lyr['b'].shape, lambda i: (0, 0)))
    for lyr in fc_layers:                       # bf16 fc weights: stay in HBM, manual DMA
        args.append(lyr['w'])
        in_specs.append(pl.BlockSpec(memory_space=pl.ANY))

    scratch = [pltpu.VMEM(lyr['w'].shape, lyr['w'].dtype) for lyr in fc_layers]
    scratch.append(pltpu.SemaphoreType.DMA((3,)))

    fn = pl.pallas_call(
        _sa3_backend_kernel,
        out_shape=jax.ShapeDtypeStruct((B, ncls_p), jnp.float32),
        grid=(nblk,),
        in_specs=in_specs,
        out_specs=pl.BlockSpec((bt, ncls_p), lambda i: (i, 0)),
        scratch_shapes=scratch,
        compiler_params=pltpu.CompilerParams(
            dimension_semantics=("parallel",),
            vmem_limit_bytes=VMEM_LIMIT_BYTES),
    )
    return fn(grouped, *args)


# ----------------------------------------------------------------------------
# Plain-JAX glue: FPS, ball query, grouping (irregular indexing)
# ----------------------------------------------------------------------------
def square_distance(a, b):
    # a: [B, S, 3], b: [B, N, 3] -> [B, S, N]
    return jnp.sum((a[:, :, None, :] - b[:, None, :, :]) ** 2, axis=-1)


def index_points(points, idx):
    # points: [B, N, C], idx: [B, ...] int -> [B, ..., C]
    return jax.vmap(lambda p, i: p[i])(points, idx)


def farthest_point_sample(xyz, npoint):
    # Deterministic start at index 0 (reference PyTorch code uses a random start).
    B, N, _ = xyz.shape

    def body(i, state):
        distance, farthest, centroids = state
        centroids = centroids.at[:, i].set(farthest)
        centroid = index_points(xyz, farthest[:, None])           # [B, 1, 3]
        dist = jnp.sum((xyz - centroid) ** 2, axis=-1)            # [B, N]
        distance = jnp.minimum(distance, dist)
        farthest = jnp.argmax(distance, axis=-1).astype(jnp.int32)
        return distance, farthest, centroids

    init = (jnp.full((B, N), 1e10, jnp.float32),
            jnp.zeros((B,), jnp.int32),
            jnp.zeros((B, npoint), jnp.int32))
    _, _, centroids = lax.fori_loop(0, npoint, body, init)
    return centroids


def query_ball_point(radius, nsample, xyz, new_xyz):
    B, N, _ = xyz.shape
    S = new_xyz.shape[1]
    sqrdists = square_distance(new_xyz, xyz)                      # [B, S, N]
    group_idx = jnp.broadcast_to(jnp.arange(N, dtype=jnp.int32), (B, S, N))
    group_idx = jnp.where(sqrdists > radius ** 2, N, group_idx)
    group_idx = jnp.sort(group_idx, axis=-1)[:, :, :nsample]
    group_first = jnp.broadcast_to(group_idx[:, :, :1], (B, S, nsample))
    group_idx = jnp.where(group_idx == N, group_first, group_idx)
    return group_idx


def sample_and_group(npoint, radius, nsample, xyz, features):
    fps_idx = farthest_point_sample(xyz, npoint)
    new_xyz = index_points(xyz, fps_idx)                          # [B, npoint, 3]
    idx = query_ball_point(radius, nsample, xyz, new_xyz)         # [B, npoint, nsample]
    grouped_xyz = index_points(xyz, idx)                          # [B, npoint, nsample, 3]
    grouped_xyz_norm = grouped_xyz - new_xyz[:, :, None, :]
    if features is not None:
        grouped_feat = index_points(features, idx)
        new_points = jnp.concatenate([grouped_xyz_norm, grouped_feat], axis=-1)
    else:
        new_points = grouped_xyz_norm
    return new_xyz, new_points


def sample_and_group_all(xyz, features):
    B, N, _ = xyz.shape
    new_xyz = jnp.zeros((B, 1, 3), xyz.dtype)
    grouped_xyz = xyz[:, None, :, :]                              # [B, 1, N, 3]
    if features is not None:
        new_points = jnp.concatenate([grouped_xyz, features[:, None, :, :]], axis=-1)
    else:
        new_points = grouped_xyz
    return new_xyz, new_points


def _pad_channels(x, to):
    pad = to - x.shape[-1]
    if pad == 0:
        return x
    widths = [(0, 0)] * (x.ndim - 1) + [(0, pad)]
    return jnp.pad(x, widths)


# ----------------------------------------------------------------------------
# Parameter init (deterministic, synthetic); BN folded + padded offline
# ----------------------------------------------------------------------------
def _fold_conv_bn(key, cin, cout, eps=1e-5):
    kw, kb, kg, kbt = jax.random.split(key, 4)
    w = jax.random.normal(kw, (cin, cout), jnp.float32) / math.sqrt(cin)
    b = 0.01 * jax.random.normal(kb, (cout,), jnp.float32)
    gamma = 1.0 + 0.1 * jax.random.normal(kg, (cout,), jnp.float32)
    beta = 0.1 * jax.random.normal(kbt, (cout,), jnp.float32)
    running_mean = jnp.zeros((cout,), jnp.float32)
    running_var = jnp.ones((cout,), jnp.float32)
    scale = gamma / jnp.sqrt(running_var + eps)       # eval-mode BN -> affine
    shift = beta - running_mean * scale
    return w * scale[None, :], b * scale + shift      # folded (W', b')


def _pack_layer(w, b, pad_in, pad_out, w_dtype=jnp.bfloat16):
    """Zero-pad a folded (W', b') layer. Weights -> bf16, biases stay fp32."""
    w = jnp.pad(w, ((0, pad_in - w.shape[0]), (0, pad_out - w.shape[1]))).astype(w_dtype)
    b = jnp.pad(b, (0, pad_out - b.shape[0])).reshape(1, pad_out).astype(jnp.float32)
    return {'w': w, 'b': b}


def init_params(key, D, num_classes):
    keys = jax.random.split(key, 12)

    def mlp(ks, cin, channels):
        """First layer's K dim padded only to a multiple of 8 (matches the
        near-natural-width grouped tensor in HBM); all Cout padded to 128 so
        intermediates/outputs stay lane-dense."""
        layers, c, k_in = [], cin, _round_up8(cin)
        for k, cout in zip(ks, channels):
            wf, bf = _fold_conv_bn(k, c, cout)
            layers.append(_pack_layer(wf, bf, k_in, _round_up(cout)))
            c, k_in = cout, _round_up(cout)
        return layers

    sa1 = mlp(keys[0:3], D[0] + 3, [D[1] // 2, D[1] // 2, D[1]])
    sa2 = mlp(keys[3:6], D[1] + 3, [D[1], D[1], D[2]])
    sa3 = mlp(keys[6:9], D[2] + 3, [D[2], D[3], D[3]])

    fc1_w, fc1_b = _fold_conv_bn(keys[9], D[3], 512)
    fc2_w, fc2_b = _fold_conv_bn(keys[10], 512, 256)
    kw, kb = jax.random.split(keys[11])
    fc3_w = jax.random.normal(kw, (256, num_classes), jnp.float32) / math.sqrt(256)
    fc3_b = 0.01 * jax.random.normal(kb, (num_classes,), jnp.float32)
    fc = [_pack_layer(fc1_w, fc1_b, _round_up(D[3]), _round_up(512)),
          _pack_layer(fc2_w, fc2_b, _round_up(512), _round_up(256)),
          _pack_layer(fc3_w, fc3_b, _round_up(256), _round_up(num_classes))]

    return {'sa1': sa1, 'sa2': sa2, 'sa3': sa3, 'fc': fc,
            'dims': {'D': D, 'num_classes': num_classes}}


# ----------------------------------------------------------------------------
# Full forward pass
# ----------------------------------------------------------------------------
def pointnet2_forward(params, pos, *, P, S, R):
    """pos: [B, N, 3] (the module's input['pos']); returns {'t_hat': [B, num_classes]}."""
    B = pos.shape[0]
    D = params['dims']['D']
    num_classes = params['dims']['num_classes']
    xyz0, feat0 = pos, None                          # normal_channel=False

    # --- SA level 1 (npoint=P[1], radius=R[1], nsample=S[1]) ---
    new_xyz1, grouped1 = sample_and_group(P[1], R[1], S[1], xyz0, feat0)
    g1 = _pad_channels(grouped1.reshape(B * P[1], S[1], grouped1.shape[-1]),
                       params['sa1'][0]['w'].shape[0]).astype(jnp.bfloat16)
    feat1 = sa_mlp_max(g1, params['sa1'])[:, :D[1]].reshape(B, P[1], D[1])

    # --- SA level 2 ---
    new_xyz2, grouped2 = sample_and_group(P[2], R[2], S[2], new_xyz1, feat1)
    g2 = _pad_channels(grouped2.reshape(B * P[2], S[2], grouped2.shape[-1]),
                       params['sa2'][0]['w'].shape[0]).astype(jnp.bfloat16)
    feat2 = sa_mlp_max(g2, params['sa2'])[:, :D[2]].reshape(B, P[2], D[2])

    # --- SA level 3 (group_all=True) fused with the task backend ---
    _, grouped3 = sample_and_group_all(new_xyz2, feat2)          # [B, 1, P2, 3+D2]
    g3 = _pad_channels(grouped3.reshape(B, grouped3.shape[2], grouped3.shape[3]),
                       params['sa3'][0]['w'].shape[0]).astype(jnp.bfloat16)
    logits_p = sa3_backend_call(g3, params['sa3'], params['fc'])  # [B, ncls_padded]
    t_hat = logits_p[:, :num_classes]
    return {'t_hat': t_hat, 'debug_outputs': {}}


if __name__ == "__main__":
    key = jax.random.PRNGKey(0)

    # Small-shape configuration consistent with the module's constructor args.
    B, N, num_classes = 2, 64, 10
    D = (0, 32, 64, 128)
    P = (None, 32, 16, 1)
    S = (None, 8, 16, 16)
    R = (None, 0.2, 0.4, None)

    kp, kx = jax.random.split(key)
    params = init_params(kp, D, num_classes)
    pos = jax.random.uniform(kx, (B, N, 3), jnp.float32)         # input['pos']

    out = pointnet2_forward(params, pos, P=P, S=S, R=R)
    t_hat = jax.block_until_ready(out['t_hat'])
    assert t_hat.shape == (B, num_classes)
    assert bool(jnp.all(jnp.isfinite(t_hat)))
    print("KERNEL_OK")
</pallas_src>

<mosaic_0001>
module attributes {stable_mosaic.version = 11 : i64} {
  func.func @_sa_mlp_max_kernel(%arg0: i32, %arg1: memref<64x8x8xbf16, #tpu.memory_space<vmem>>, %arg2: memref<8x128xbf16, #tpu.memory_space<vmem>>, %arg3: memref<1x128xf32, #tpu.memory_space<vmem>>, %arg4: memref<128x128xbf16, #tpu.memory_space<vmem>>, %arg5: memref<1x128xf32, #tpu.memory_space<vmem>>, %arg6: memref<128x128xbf16, #tpu.memory_space<vmem>>, %arg7: memref<1x128xf32, #tpu.memory_space<vmem>>, %arg8: memref<64x128xbf16, #tpu.memory_space<vmem>>) attributes {dimension_semantics = [#tpu.dimension_semantics<parallel>], iteration_bounds = array<i64: 1>, scalar_prefetch = 0 : i64, scratch_operands = 0 : i64, tpu.core_type = #tpu.core_type<tc>, window_params = [{transform_indices = @transform_0, window_bounds = array<i64: 64, 8, 8>}, {pipeline_mode = #tpu.pipeline_mode<synchronous>, transform_indices = @transform_1, window_bounds = array<i64: 8, 128>}, {pipeline_mode = #tpu.pipeline_mode<synchronous>, transform_indices = @transform_2, window_bounds = array<i64: 1, 128>}, {pipeline_mode = #tpu.pipeline_mode<synchronous>, transform_indices = @transform_3, window_bounds = array<i64: 128, 128>}, {pipeline_mode = #tpu.pipeline_mode<synchronous>, transform_indices = @transform_4, window_bounds = array<i64: 1, 128>}, {pipeline_mode = #tpu.pipeline_mode<synchronous>, transform_indices = @transform_5, window_bounds = array<i64: 128, 128>}, {pipeline_mode = #tpu.pipeline_mode<synchronous>, transform_indices = @transform_6, window_bounds = array<i64: 1, 128>}, {transform_indices = @transform_7, window_bounds = array<i64: 64, 128>}]} {
    %c0 = arith.constant 0 : index
    %c0_0 = arith.constant 0 : index
    %c0_1 = arith.constant 0 : index
    %0 = vector.load %arg1[%c0, %c0_0, %c0_1] : memref<64x8x8xbf16, #tpu.memory_space<vmem>>, vector<64x8x8xbf16>
    %1 = vector.shape_cast %0 : vector<64x8x8xbf16> to vector<512x8xbf16>
    %c0_2 = arith.constant 0 : index
    %c0_3 = arith.constant 0 : index
    %2 = vector.load %arg2[%c0_2, %c0_3] : memref<8x128xbf16, #tpu.memory_space<vmem>>, vector<8x128xbf16>
    %cst = arith.constant dense<0.000000e+00> : vector<512x128xf32>
    %3 = tpu.matmul %1, %2, %cst {dimension_numbers = #tpu.dot_dimension_numbers<[1], [0], [0], [1], [0, 0, 1, 1], [], []>} : vector<512x8xbf16>, vector<8x128xbf16>, vector<512x128xf32> -> vector<512x128xf32>
    %c0_4 = arith.constant 0 : index
    %c0_5 = arith.constant 0 : index
    %4 = vector.load %arg3[%c0_4, %c0_5] : memref<1x128xf32, #tpu.memory_space<vmem>>, vector<1x128xf32>
    %5 = vector.broadcast %4 : vector<1x128xf32> to vector<512x128xf32>
    %6 = arith.addf %3, %5 : vector<512x128xf32>
    %cst_6 = arith.constant 0.000000e+00 : f32
    %7 = vector.broadcast %cst_6 : f32 to vector<512x128xf32>
    %8 = arith.maximumf %6, %7 : vector<512x128xf32>
    %9 = arith.truncf %8 : vector<512x128xf32> to vector<512x128xbf16>
    %c0_7 = arith.constant 0 : index
    %c0_8 = arith.constant 0 : index
    %10 = vector.load %arg4[%c0_7, %c0_8] : memref<128x128xbf16, #tpu.memory_space<vmem>>, vector<128x128xbf16>
    %cst_9 = arith.constant dense<0.000000e+00> : vector<512x128xf32>
    %11 = tpu.matmul %9, %10, %cst_9 {dimension_numbers = #tpu.dot_dimension_numbers<[1], [0], [0], [1], [0, 0, 1, 1], [], []>} : vector<512x128xbf16>, vector<128x128xbf16>, vector<512x128xf32> -> vector<512x128xf32>
    %c0_10 = arith.constant 0 : index
    %c0_11 = arith.constant 0 : index
    %12 = vector.load %arg5[%c0_10, %c0_11] : memref<1x128xf32, #tpu.memory_space<vmem>>, vector<1x128xf32>
    %13 = vector.broadcast %12 : vector<1x128xf32> to vector<512x128xf32>
    %14 = arith.addf %11, %13 : vector<512x128xf32>
    %cst_12 = arith.constant 0.000000e+00 : f32
    %15 = vector.broadcast %cst_12 : f32 to vector<512x128xf32>
    %16 = arith.maximumf %14, %15 : vector<512x128xf32>
    %17 = arith.truncf %16 : vector<512x128xf32> to vector<512x128xbf16>
    %c0_13 = arith.constant 0 : index
    %c0_14 = arith.constant 0 : index
    %18 = vector.load %arg6[%c0_13, %c0_14] : memref<128x128xbf16, #tpu.memory_space<vmem>>, vector<128x128xbf16>
    %cst_15 = arith.constant dense<0.000000e+00> : vector<512x128xf32>
    %19 = tpu.matmul %17, %18, %cst_15 {dimension_numbers = #tpu.dot_dimension_numbers<[1], [0], [0], [1], [0, 0, 1, 1], [], []>} : vector<512x128xbf16>, vector<128x128xbf16>, vector<512x128xf32> -> vector<512x128xf32>
    %c0_16 = arith.constant 0 : index
    %c0_17 = arith.constant 0 : index
    %20 = vector.load %arg7[%c0_16, %c0_17] : memref<1x128xf32, #tpu.memory_space<vmem>>, vector<1x128xf32>
    %21 = vector.broadcast %20 : vector<1x128xf32> to vector<512x128xf32>
    %22 = arith.addf %19, %21 : vector<512x128xf32>
    %cst_18 = arith.constant 0.000000e+00 : f32
    %23 = vector.broadcast %cst_18 : f32 to vector<512x128xf32>
    %24 = arith.maximumf %22, %23 : vector<512x128xf32>
    %25 = vector.shape_cast %24 : vector<512x128xf32> to vector<64x8x128xf32>
    %cst_19 = arith.constant dense<0xFF800000> : vector<64x128xf32>
    %26 = vector.multi_reduction <maximumf>, %25, %cst_19 [1] : vector<64x8x128xf32> to vector<64x128xf32>
    %27 = arith.truncf %26 : vector<64x128xf32> to vector<64x128xbf16>
    %c0_20 = arith.constant 0 : index
    %c0_21 = arith.constant 0 : index
    %28 = vector.load %arg8[%c0_20, %c0_21] : memref<64x128xbf16, #tpu.memory_space<vmem>>, vector<64x128xbf16>
    tpu.vector_store %arg8[%c0_20, %c0_21], %27 {strides = array<i32>} : memref<64x128xbf16, #tpu.memory_space<vmem>>, vector<64x128xbf16>,
    return
  }
  func.func @transform_0(%arg0: i32) -> (i32, i32, i32) {
    %c0_i32 = arith.constant 0 : i32
    %c0_i32_0 = arith.constant 0 : i32
    %c0_i32_1 = arith.constant 0 : i32
    return %arg0, %c0_i32, %c0_i32_0 : i32, i32, i32
  }
  func.func @transform_1(%arg0: i32) -> (i32, i32) {
    %c0_i32 = arith.constant 0 : i32
    %c0_i32_0 = arith.constant 0 : i32
    %c0_i32_1 = arith.constant 0 : i32
    return %c0_i32, %c0_i32_0 : i32, i32
  }
  func.func @transform_2(%arg0: i32) -> (i32, i32) {
    %c0_i32 = arith.constant 0 : i32
    %c0_i32_0 = arith.constant 0 : i32
    %c0_i32_1 = arith.constant 0 : i32
    return %c0_i32, %c0_i32_0 : i32, i32
  }
  func.func @transform_3(%arg0: i32) -> (i32, i32) {
    %c0_i32 = arith.constant 0 : i32
    %c0_i32_0 = arith.constant 0 : i32
    %c0_i32_1 = arith.constant 0 : i32
    return %c0_i32, %c0_i32_0 : i32, i32
  }
  func.func @transform_4(%arg0: i32) -> (i32, i32) {
    %c0_i32 = arith.constant 0 : i32
    %c0_i32_0 = arith.constant 0 : i32
    %c0_i32_1 = arith.constant 0 : i32
    return %c0_i32, %c0_i32_0 : i32, i32
  }
  func.func @transform_5(%arg0: i32) -> (i32, i32) {
    %c0_i32 = arith.constant 0 : i32
    %c0_i32_0 = arith.constant 0 : i32
    %c0_i32_1 = arith.constant 0 : i32
    return %c0_i32, %c0_i32_0 : i32, i32
  }
  func.func @transform_6(%arg0: i32) -> (i32, i32) {
    %c0_i32 = arith.constant 0 : i32
    %c0_i32_0 = arith.constant 0 : i32
    %c0_i32_1 = arith.constant 0 : i32
    return %c0_i32, %c0_i32_0 : i32, i32
  }
  func.func @transform_7(%arg0: i32) -> (i32, i32) {
    %c0_i32 = arith.constant 0 : i32
    %c0_i32_0 = arith.constant 0 : i32
    return %arg0, %c0_i32 : i32, i32
  }
}

</mosaic_0001>

<llo_original>
// kernel: tpu_custom_call.1
$region0: #{tpu_custom_call.1}
  #allocation0 [shape = 'u32[]', space=smem, size = 0x4, offset = 0x4, fixed_abs, tag = 'smem constant byte address 0x4 - core index']
  #allocation1 [shape = 'u32[144,128]{1,0:T(1,128)}', space=vmem, size = 0x12000, scoped, tag = 'internal scratch']
  %s0 = inlined_call_operand.vmem [shape: bf16[64,8,8], index: 0, kind: input, shape index: {}]
  %s1 = inlined_call_operand.vmem [shape: bf16[8,128], index: 1, kind: input, shape index: {}]
  %s2 = inlined_call_operand.vmem [shape: f32[1,128], index: 2, kind: input, shape index: {}]
  %s3 = inlined_call_operand.vmem [shape: bf16[128,128], index: 3, kind: input, shape index: {}]
  %s4 = inlined_call_operand.vmem [shape: f32[1,128], index: 4, kind: input, shape index: {}]
  %s5 = inlined_call_operand.vmem [shape: bf16[128,128], index: 5, kind: input, shape index: {}]
  %s6 = inlined_call_operand.vmem [shape: f32[1,128], index: 6, kind: input, shape index: {}]
  %s7 = inlined_call_operand.hbm [shape: bf16[64,128], index: 7, kind: output, shape index: {}]
  %s8 = sld [smem:[#allocation0]]
  $region38: #{tpu_custom_call.1} parent=0
    _
  %s10 = ssub.s32 1, %s8
  %s11 = scalar_select 0, %s10, %s8
  $region1: #{tpu_custom_call.1} parent=0
    #allocation2 [shape = 'u8[16384]{0}', space=vmem, size = 0x4000, scoped, tag = 'output window, operand 0, single buffered']
    #allocation3 [shape = 's32[1]{0}', space=sflag, size = 0x4, scoped, tag = 'scoped memory for tpu_custom_call.1']
    %12 = vsyncpa [#allocation3], 0
    // Predicated region
    $region2: #{tpu_custom_call.1} parent=1 // pred_check
      _
    $region3: #{tpu_custom_call.1} parent=1 // pred_check_branch
      %14 = sbr.rel (0) target = $region5
    $region4: #{tpu_custom_call.1} parent=1 // pred_region
      _
    $region5: #{tpu_custom_call.1} parent=1 // pred_fallthru
      _
    // Predicated region
    $region6: #{tpu_custom_call.1} parent=1 // pred_check
      _
    $region7: #{tpu_custom_call.1} parent=1 // pred_check_branch
      %16 = sbr.rel (0) target = $region9
    $region8: #{tpu_custom_call.1} parent=1 // pred_region
      _
    $region9: #{tpu_custom_call.1} parent=1 // pred_fallthru
      _
    // Predicated region
    $region10: #{tpu_custom_call.1} parent=1 // pred_check
      _
    $region11: #{tpu_custom_call.1} parent=1 // pred_check_branch
      %18 = sbr.rel (0) target = $region13
    $region12: #{tpu_custom_call.1} parent=1 // pred_region
      _
    $region13: #{tpu_custom_call.1} parent=1 // pred_fallthru
      _
    // Predicated region
    $region14: #{tpu_custom_call.1} parent=1 // pred_check
      _
    $region15: #{tpu_custom_call.1} parent=1 // pred_check_branch
      %20 = sbr.rel (0) target = $region17
    $region16: #{tpu_custom_call.1} parent=1 // pred_region
      _
    $region17: #{tpu_custom_call.1} parent=1 // pred_fallthru
      _
    // Predicated region
    $region18: #{tpu_custom_call.1} parent=1 // pred_check
      _
    $region19: #{tpu_custom_call.1} parent=1 // pred_check_branch
      %22 = sbr.rel (0) target = $region21
    $region20: #{tpu_custom_call.1} parent=1 // pred_region
      _
    $region21: #{tpu_custom_call.1} parent=1 // pred_fallthru
      _
    // Predicated region
    $region22: #{tpu_custom_call.1} parent=1 // pred_check
      _
    $region23: #{tpu_custom_call.1} parent=1 // pred_check_branch
      %24 = sbr.rel (0) target = $region25
    $region24: #{tpu_custom_call.1} parent=1 // pred_region
      _
    $region25: #{tpu_custom_call.1} parent=1 // pred_fallthru
      _
    // Predicated region
    $region26: #{tpu_custom_call.1} parent=1 // pred_check
      _
    $region27: #{tpu_custom_call.1} parent=1 // pred_check_branch
      %26 = sbr.rel (0) target = $region29
    $region28: #{tpu_custom_call.1} parent=1 // pred_region
      _
    $region29: #{tpu_custom_call.1} parent=1 // pred_fallthru
      _
    %v28 = vld [vmem:[%s0] sm:$0xf]
    %v29 = vld [vmem:[%s0 + $0x4] sm:$0xf]
    %v30 = vld [vmem:[%s0 + $0x8] sm:$0xf]
    %v31 = vld [vmem:[%s0 + $0xc] sm:$0xf]
    %v32 = vld [vmem:[%s0 + $0x10] sm:$0xf]
    %v33 = vld [vmem:[%s0 + $0x14] sm:$0xf]
    %v34 = vld [vmem:[%s0 + $0x18] sm:$0xf]
    %v35 = vld [vmem:[%s0 + $0x1c] sm:$0xf]
    %v36 = vld [vmem:[%s0 + $0x20] sm:$0xf]
    %v37 = vld [vmem:[%s0 + $0x24] sm:$0xf]
    %v38 = vld [vmem:[%s0 + $0x28] sm:$0xf]
    %v39 = vld [vmem:[%s0 + $0x2c] sm:$0xf]
    %v40 = vld [vmem:[%s0 + $0x30] sm:$0xf]
    %v41 = vld [vmem:[%s0 + $0x34] sm:$0xf]
    %v42 = vld [vmem:[%s0 + $0x38] sm:$0xf]
    %v43 = vld [vmem:[%s0 + $0x3c] sm:$0xf]
    %v44 = vld [vmem:[%s0 + $0x40] sm:$0xf]
    %v45 = vld [vmem:[%s0 + $0x44] sm:$0xf]
    %v46 = vld [vmem:[%s0 + $0x48] sm:$0xf]
    %v47 = vld [vmem:[%s0 + $0x4c] sm:$0xf]
    %v48 = vld [vmem:[%s0 + $0x50] sm:$0xf]
    %v49 = vld [vmem:[%s0 + $0x54] sm:$0xf]
    %v50 = vld [vmem:[%s0 + $0x58] sm:$0xf]
    %v51 = vld [vmem:[%s0 + $0x5c] sm:$0xf]
    %v52 = vld [vmem:[%s0 + $0x60] sm:$0xf]
    %v53 = vld [vmem:[%s0 + $0x64] sm:$0xf]
    %v54 = vld [vmem:[%s0 + $0x68] sm:$0xf]
    %v55 = vld [vmem:[%s0 + $0x6c] sm:$0xf]
    %v56 = vld [vmem:[%s0 + $0x70] sm:$0xf]
    %v57 = vld [vmem:[%s0 + $0x74] sm:$0xf]
    %v58 = vld [vmem:[%s0 + $0x78] sm:$0xf]
    %v59 = vld [vmem:[%s0 + $0x7c] sm:$0xf]
    %v60 = vld [vmem:[%s0 + $0x80] sm:$0xf]
    %v61 = vld [vmem:[%s0 + $0x84] sm:$0xf]
    %v62 = vld [vmem:[%s0 + $0x88] sm:$0xf]
    %v63 = vld [vmem:[%s0 + $0x8c] sm:$0xf]
    %v64 = vld [vmem:[%s0 + $0x90] sm:$0xf]
    %v65 = vld [vmem:[%s0 + $0x94] sm:$0xf]
    %v66 = vld [vmem:[%s0 + $0x98] sm:$0xf]
    %v67 = vld [vmem:[%s0 + $0x9c] sm:$0xf]
    %v68 = vld [vmem:[%s0 + $0xa0] sm:$0xf]
    %v69 = vld [vmem:[%s0 + $0xa4] sm:$0xf]
    %v70 = vld [vmem:[%s0 + $0xa8] sm:$0xf]
    %v71 = vld [vmem:[%s0 + $0xac] sm:$0xf]
    %v72 = vld [vmem:[%s0 + $0xb0] sm:$0xf]
    %v73 = vld [vmem:[%s0 + $0xb4] sm:$0xf]
    %v74 = vld [vmem:[%s0 + $0xb8] sm:$0xf]
    %v75 = vld [vmem:[%s0 + $0xbc] sm:$0xf]
    %v76 = vld [vmem:[%s0 + $0xc0] sm:$0xf]
    %v77 = vld [vmem:[%s0 + $0xc4] sm:$0xf]
    %v78 = vld [vmem:[%s0 + $0xc8] sm:$0xf]
    %v79 = vld [vmem:[%s0 + $0xcc] sm:$0xf]
    %v80 = vld [vmem:[%s0 + $0xd0] sm:$0xf]
    %v81 = vld [vmem:[%s0 + $0xd4] sm:$0xf]
    %v82 = vld [vmem:[%s0 + $0xd8] sm:$0xf]
    %v83 = vld [vmem:[%s0 + $0xdc] sm:$0xf]
    %v84 = vld [vmem:[%s0 + $0xe0] sm:$0xf]
    %v85 = vld [vmem:[%s0 + $0xe4] sm:$0xf]
    %v86 = vld [vmem:[%s0 + $0xe8] sm:$0xf]
    %v87 = vld [vmem:[%s0 + $0xec] sm:$0xf]
    %v88 = vld [vmem:[%s0 + $0xf0] sm:$0xf]
    %v89 = vld [vmem:[%s0 + $0xf4] sm:$0xf]
    %v90 = vld [vmem:[%s0 + $0xf8] sm:$0xf]
    %v91 = vld [vmem:[%s0 + $0xfc] sm:$0xf]
    %v92 = vld [vmem:[%s1] sm:$0xf]
    %v93 = vld [vmem:[%s2] sm:$0x1]
    %v95 = vlaneseq
    %v96 = vshrl.u32 %v95, 7
    %v97 = vsub.s32 0, %v96
    %v98 = vrot.slane %v93, %v97
    %v164 = vunpack.c.l.b16 %v28
    %v165 = vunpack.c.l.b16 %v29
    %v166 = vunpack.c.l.b16 %v30
    %v167 = vunpack.c.l.b16 %v31
    %v168 = vunpack.c.l.b16 %v32
    %v169 = vunpack.c.l.b16 %v33
    %v170 = vunpack.c.l.b16 %v34
    %v171 = vunpack.c.l.b16 %v35
    %v172 = vunpack.c.l.b16 %v36
    %v173 = vunpack.c.l.b16 %v37
    %v174 = vunpack.c.l.b16 %v38
    %v175 = vunpack.c.l.b16 %v39
    %v176 = vunpack.c.l.b16 %v40
    %v177 = vunpack.c.l.b16 %v41
    %v178 = vunpack.c.l.b16 %v42
    %v179 = vunpack.c.l.b16 %v43
    %v180 = vunpack.c.l.b16 %v44
    %v181 = vunpack.c.l.b16 %v45
    %v182 = vunpack.c.l.b16 %v46
    %v183 = vunpack.c.l.b16 %v47
    %v184 = vunpack.c.l.b16 %v48
    %v185 = vunpack.c.l.b16 %v49
    %v186 = vunpack.c.l.b16 %v50
    %v187 = vunpack.c.l.b16 %v51
    %v188 = vunpack.c.l.b16 %v52
    %v189 = vunpack.c.l.b16 %v53
    %v190 = vunpack.c.l.b16 %v54
    %v191 = vunpack.c.l.b16 %v55
    %v192 = vunpack.c.l.b16 %v56
    %v193 = vunpack.c.l.b16 %v57
    %v194 = vunpack.c.l.b16 %v58
    %v195 = vunpack.c.l.b16 %v59
    %v196 = vunpack.c.l.b16 %v60
    %v197 = vunpack.c.l.b16 %v61
    %v198 = vunpack.c.l.b16 %v62
    %v199 = vunpack.c.l.b16 %v63
    %v200 = vunpack.c.l.b16 %v64
    %v201 = vunpack.c.l.b16 %v65
    %v202 = vunpack.c.l.b16 %v66
    %v203 = vunpack.c.l.b16 %v67
    %v204 = vunpack.c.l.b16 %v68
    %v205 = vunpack.c.l.b16 %v69
    %v206 = vunpack.c.l.b16 %v70
    %v207 = vunpack.c.l.b16 %v71
    %v208 = vunpack.c.l.b16 %v72
    %v209 = vunpack.c.l.b16 %v73
    %v210 = vunpack.c.l.b16 %v74
    %v211 = vunpack.c.l.b16 %v75
    %v212 = vunpack.c.l.b16 %v76
    %v213 = vunpack.c.l.b16 %v77
    %v214 = vunpack.c.l.b16 %v78
    %v215 = vunpack.c.l.b16 %v79
    %v216 = vunpack.c.l.b16 %v80
    %v217 = vunpack.c.l.b16 %v81
    %v218 = vunpack.c.l.b16 %v82
    %v219 = vunpack.c.l.b16 %v83
    %v220 = vunpack.c.l.b16 %v84
    %v221 = vunpack.c.l.b16 %v85
    %v222 = vunpack.c.l.b16 %v86
    %v223 = vunpack.c.l.b16 %v87
    %v224 = vunpack.c.l.b16 %v88
    %v225 = vunpack.c.l.b16 %v89
    %v226 = vunpack.c.l.b16 %v90
    %v227 = vunpack.c.l.b16 %v91
    %v228 = vpack.c.b16 %v165, %v164
    %v229 = vpack.c.b16 %v167, %v166
    %v230 = vpack.c.b16 %v169, %v168
    %v231 = vpack.c.b16 %v171, %v170
    %v232 = vpack.c.b16 %v173, %v172
    %v233 = vpack.c.b16 %v175, %v174
    %v234 = vpack.c.b16 %v177, %v176
    %v235 = vpack.c.b16 %v179, %v178
    %v236 = vpack.c.b16 %v181, %v180
    %v237 = vpack.c.b16 %v183, %v182
    %v238 = vpack.c.b16 %v185, %v184
    %v239 = vpack.c.b16 %v187, %v186
    %v240 = vpack.c.b16 %v189, %v188
    %v241 = vpack.c.b16 %v191, %v190
    %v242 = vpack.c.b16 %v193, %v192
    %v243 = vpack.c.b16 %v195, %v194
    %v244 = vpack.c.b16 %v197, %v196
    %v245 = vpack.c.b16 %v199, %v198
    %v246 = vpack.c.b16 %v201, %v200
    %v247 = vpack.c.b16 %v203, %v202
    %v248 = vpack.c.b16 %v205, %v204
    %v249 = vpack.c.b16 %v207, %v206
    %v250 = vpack.c.b16 %v209, %v208
    %v251 = vpack.c.b16 %v211, %v210
    %v252 = vpack.c.b16 %v213, %v212
    %v253 = vpack.c.b16 %v215, %v214
    %v254 = vpack.c.b16 %v217, %v216
    %v255 = vpack.c.b16 %v219, %v218
    %v256 = vpack.c.b16 %v221, %v220
    %v257 = vpack.c.b16 %v223, %v222
    %v258 = vpack.c.b16 %v225, %v224
    %v259 = vpack.c.b16 %v227, %v226
    %vm260 = vcmask 64512
    %v262 = vsel %vm260, %v228, 0
    %v265 = vsel %vm260, %v229, 0
    %v268 = vsel %vm260, %v230, 0
    %v271 = vsel %vm260, %v231, 0
    %v274 = vsel %vm260, %v232, 0
    %v277 = vsel %vm260, %v233, 0
    %v280 = vsel %vm260, %v234, 0
    %v283 = vsel %vm260, %v235, 0
    %v286 = vsel %vm260, %v236, 0
    %v289 = vsel %vm260, %v237, 0
    %v292 = vsel %vm260, %v238, 0
    %v295 = vsel %vm260, %v239, 0
    %v298 = vsel %vm260, %v240, 0
    %v301 = vsel %vm260, %v241, 0
    %v304 = vsel %vm260, %v242, 0
    %v307 = vsel %vm260, %v243, 0
    %v310 = vsel %vm260, %v244, 0
    %v313 = vsel %vm260, %v245, 0
    %v316 = vsel %vm260, %v246, 0
    %v319 = vsel %vm260, %v247, 0
    %v322 = vsel %vm260, %v248, 0
    %v325 = vsel %vm260, %v249, 0
    %v328 = vsel %vm260, %v250, 0
    %v331 = vsel %vm260, %v251, 0
    %v334 = vsel %vm260, %v252, 0
    %v337 = vsel %vm260, %v253, 0
    %v340 = vsel %vm260, %v254, 0
    %v343 = vsel %vm260, %v255, 0
    %v346 = vsel %vm260, %v256, 0
    %v349 = vsel %vm260, %v257, 0
    %v352 = vsel %vm260, %v258, 0
    %v355 = vsel %vm260, %v259, 0
    %vm357 = vcmask 1043456
    %v359 = vsel %vm357, %v92, 0
    %361 = vmatprep.subr.bf16.mxu0 0
    %362 = vmatpush1.bf16.msra.mxu0 %v359
    %363 = vmatprep.subr.bf16.mxu0 0
    %364 = vmatpush1.bf16.msra.mxu0 0
    %365 = vmatprep.subr.bf16.mxu0 0
    %366 = vmatpush1.bf16.msra.mxu0 0
    %367 = vmatprep.subr.bf16.mxu0 0
    %368 = vmatpush1.bf16.msra.mxu0 0
    %369 = vmatprep.subr.bf16.mxu0 0
    %370 = vmatpush1.bf16.msra.mxu0 0
    %371 = vmatprep.subr.bf16.mxu0 0
    %372 = vmatpush1.bf16.msra.mxu0 0
    %373 = vmatprep.subr.bf16.mxu0 0
    %374 = vmatpush1.bf16.msra.mxu0 0
    %375 = vmatprep.subr.bf16.mxu0 0
    %376 = vmatpush1.bf16.msra.mxu0 0
    %377 = vmatprep.subr.bf16.mxu0 0
    %378 = vmatpush1.bf16.msra.mxu0 0
    %379 = vmatprep.subr.bf16.mxu0 0
    %380 = vmatpush1.bf16.msra.mxu0 0
    %381 = vmatprep.subr.bf16.mxu0 0
    %382 = vmatpush1.bf16.msra.mxu0 0
    %383 = vmatprep.subr.bf16.mxu0 0
    %384 = vmatpush1.bf16.msra.mxu0 0
    %385 = vmatprep.subr.bf16.mxu0 0
    %386 = vmatpush1.bf16.msra.mxu0 0
    %387 = vmatprep.subr.bf16.mxu0 0
    %388 = vmatpush1.bf16.msra.mxu0 0
    %389 = vmatprep.subr.bf16.mxu0 0
    %390 = vmatpush1.bf16.msra.mxu0 0
    %391 = vmatprep.subr.bf16.mxu0 0
    %392 = vmatpush1.bf16.msra.mxu0 0
    %393 = vmatprep.mubr.bf16.mxu0 0
    %394 = vmatmul.mubr.bf16.gmra.mrb[0].mxu0 %v262
    %v395 = vpop.f32.mrb[0].mxu0
    %v396 = vadd.f32 %v98, %v395
    %v397 = vpop.f32.mrb[0].mxu0
    %v398 = vpop.f32.mrb[0].mxu0
    %v399 = vadd.f32 %v98, %v398
    %v400 = vpop.f32.mrb[0].mxu0
    %401 = vmatprep.mubr.bf16.mxu0 0
    %402 = vmatmul.mubr.bf16.gmra.mrb[0].mxu0 %v265
    %v403 = vpop.f32.mrb[0].mxu0
    %v404 = vadd.f32 %v98, %v403
    %v405 = vpop.f32.mrb[0].mxu0
    %v406 = vpop.f32.mrb[0].mxu0
    %v407 = vadd.f32 %v98, %v406
    %v408 = vpop.f32.mrb[0].mxu0
    %409 = vmatprep.mubr.bf16.mxu0 0
    %410 = vmatmul.mubr.bf16.gmra.mrb[0].mxu0 %v268
    %v411 = vpop.f32.mrb[0].mxu0
    %v412 = vadd.f32 %v98, %v411
    %v413 = vpop.f32.mrb[0].mxu0
    %v414 = vpop.f32.mrb[0].mxu0
    %v415 = vadd.f32 %v98, %v414
    %v416 = vpop.f32.mrb[0].mxu0
    %417 = vmatprep.mubr.bf16.mxu0 0
    %418 = vmatmul.mubr.bf16.gmra.mrb[0].mxu0 %v271
    %v419 = vpop.f32.mrb[0].mxu0
    %v420 = vadd.f32 %v98, %v419
    %v421 = vpop.f32.mrb[0].mxu0
    %v422 = vpop.f32.mrb[0].mxu0
    %v423 = vadd.f32 %v98, %v422
    %v424 = vpop.f32.mrb[0].mxu0
    %425 = vmatprep.mubr.bf16.mxu0 0
    %426 = vmatmul.mubr.bf16.gmra.mrb[0].mxu0 %v274
    %v427 = vpop.f32.mrb[0].mxu0
    %v428 = vadd.f32 %v98, %v427
    %v429 = vpop.f32.mrb[0].mxu0
    %v430 = vpop.f32.mrb[0].mxu0
    %v431 = vadd.f32 %v98, %v430
    %v432 = vpop.f32.mrb[0].mxu0
    %433 = vmatprep.mubr.bf16.mxu0 0
    %434 = vmatmul.mubr.bf16.gmra.mrb[0].mxu0 %v277
    %v435 = vpop.f32.mrb[0].mxu0
    %v436 = vadd.f32 %v98, %v435
    %v437 = vpop.f32.mrb[0].mxu0
    %v438 = vpop.f32.mrb[0].mxu0
    %v439 = vadd.f32 %v98, %v438
    %v440 = vpop.f32.mrb[0].mxu0
    %441 = vmatprep.mubr.bf16.mxu0 0
    %442 = vmatmul.mubr.bf16.gmra.mrb[0].mxu0 %v280
    %v443 = vpop.f32.mrb[0].mxu0
    %v444 = vadd.f32 %v98, %v443
    %v445 = vpop.f32.mrb[0].mxu0
    %v446 = vpop.f32.mrb[0].mxu0
    %v447 = vadd.f32 %v98, %v446
    %v448 = vpop.f32.mrb[0].mxu0
    %449 = vmatprep.mubr.bf16.mxu0 0
    %450 = vmatmul.mubr.bf16.gmra.mrb[0].mxu0 %v283
    %v451 = vpop.f32.mrb[0].mxu0
    %v452 = vadd.f32 %v98, %v451
    %v453 = vpop.f32.mrb[0].mxu0
    %v454 = vpop.f32.mrb[0].mxu0
    %v455 = vadd.f32 %v98, %v454
    %v456 = vpop.f32.mrb[0].mxu0
    %457 = vmatprep.mubr.bf16.mxu0 0
    %458 = vmatmul.mubr.bf16.gmra.mrb[0].mxu0 %v286
    %v459 = vpop.f32.mrb[0].mxu0
    %v460 = vadd.f32 %v98, %v459
    %v461 = vpop.f32.mrb[0].mxu0
    %v462 = vpop.f32.mrb[0].mxu0
    %v463 = vadd.f32 %v98, %v462
    %v464 = vpop.f32.mrb[0].mxu0
    %465 = vmatprep.mubr.bf16.mxu0 0
    %466 = vmatmul.mubr.bf16.gmra.mrb[0].mxu0 %v289
    %v467 = vpop.f32.mrb[0].mxu0
    %v468 = vadd.f32 %v98, %v467
    %v469 = vpop.f32.mrb[0].mxu0
    %v470 = vpop.f32.mrb[0].mxu0
    %v471 = vadd.f32 %v98, %v470
    %v472 = vpop.f32.mrb[0].mxu0
    %473 = vmatprep.mubr.bf16.mxu0 0
    %474 = vmatmul.mubr.bf16.gmra.mrb[0].mxu0 %v292
    %v475 = vpop.f32.mrb[0].mxu0
    %v476 = vadd.f32 %v98, %v475
    %v477 = vpop.f32.mrb[0].mxu0
    %v478 = vpop.f32.mrb[0].mxu0
    %v479 = vadd.f32 %v98, %v478
    %v480 = vpop.f32.mrb[0].mxu0
    %481 = vmatprep.mubr.bf16.mxu0 0
    %482 = vmatmul.mubr.bf16.gmra.mrb[0].mxu0 %v295
    %v483 = vpop.f32.mrb[0].mxu0
    %v484 = vadd.f32 %v98, %v483
    %v485 = vpop.f32.mrb[0].mxu0
    %v486 = vpop.f32.mrb[0].mxu0
    %v487 = vadd.f32 %v98, %v486
    %v488 = vpop.f32.mrb[0].mxu0
    %489 = vmatprep.mubr.bf16.mxu0 0
    %490 = vmatmul.mubr.bf16.gmra.mrb[0].mxu0 %v298
    %v491 = vpop.f32.mrb[0].mxu0
    %v492 = vadd.f32 %v98, %v491
    %v493 = vpop.f32.mrb[0].mxu0
    %v494 = vpop.f32.mrb[0].mxu0
    %v495 = vadd.f32 %v98, %v494
    %v496 = vpop.f32.mrb[0].mxu0
    %497 = vmatprep.mubr.bf16.mxu0 0
    %498 = vmatmul.mubr.bf16.gmra.mrb[0].mxu0 %v301
    %v499 = vpop.f32.mrb[0].mxu0
    %v500 = vadd.f32 %v98, %v499
    %v501 = vpop.f32.mrb[0].mxu0
    %v502 = vpop.f32.mrb[0].mxu0
    %v503 = vadd.f32 %v98, %v502
    %v504 = vpop.f32.mrb[0].mxu0
    %505 = vmatprep.mubr.bf16.mxu0 0
    %506 = vmatmul.mubr.bf16.gmra.mrb[0].mxu0 %v304
    %v507 = vpop.f32.mrb[0].mxu0
    %v508 = vadd.f32 %v98, %v507
    %v509 = vpop.f32.mrb[0].mxu0
    %v510 = vpop.f32.mrb[0].mxu0
    %v511 = vadd.f32 %v98, %v510
    %v512 = vpop.f32.mrb[0].mxu0
    %513 = vmatprep.mubr.bf16.mxu0 0
    %514 = vmatmul.mubr.bf16.gmra.mrb[0].mxu0 %v307
    %v515 = vpop.f32.mrb[0].mxu0
    %v516 = vadd.f32 %v98, %v515
    %v517 = vpop.f32.mrb[0].mxu0
    %v518 = vpop.f32.mrb[0].mxu0
    %v519 = vadd.f32 %v98, %v518
    %v520 = vpop.f32.mrb[0].mxu0
    %521 = vmatprep.mubr.bf16.mxu0 0
    %522 = vmatmul.mubr.bf16.gmra.mrb[0].mxu0 %v310
    %v523 = vpop.f32.mrb[0].mxu0
    %v524 = vadd.f32 %v98, %v523
    %v525 = vpop.f32.mrb[0].mxu0
    %v526 = vpop.f32.mrb[0].mxu0
    %v527 = vadd.f32 %v98, %v526
    %v528 = vpop.f32.mrb[0].mxu0
    %529 = vmatprep.mubr.bf16.mxu0 0
    %530 = vmatmul.mubr.bf16.gmra.mrb[0].mxu0 %v313
    %v531 = vpop.f32.mrb[0].mxu0
    %v532 = vadd.f32 %v98, %v531
    %v533 = vpop.f32.mrb[0].mxu0
    %v534 = vpop.f32.mrb[0].mxu0
    %v535 = vadd.f32 %v98, %v534
    %v536 = vpop.f32.mrb[0].mxu0
    %537 = vmatprep.mubr.bf16.mxu0 0
    %538 = vmatmul.mubr.bf16.gmra.mrb[0].mxu0 %v316
    %v539 = vpop.f32.mrb[0].mxu0
    %v540 = vadd.f32 %v98, %v539
    %v541 = vpop.f32.mrb[0].mxu0
    %v542 = vpop.f32.mrb[0].mxu0
    %v543 = vadd.f32 %v98, %v542
    %v544 = vpop.f32.mrb[0].mxu0
    %545 = vmatprep.mubr.bf16.mxu0 0
    %546 = vmatmul.mubr.bf16.gmra.mrb[0].mxu0 %v319
    %v547 = vpop.f32.mrb[0].mxu0
    %v548 = vadd.f32 %v98, %v547
    %v549 = vpop.f32.mrb[0].mxu0
    %v550 = vpop.f32.mrb[0].mxu0
    %v551 = vadd.f32 %v98, %v550
    %v552 = vpop.f32.mrb[0].mxu0
    %553 = vmatprep.mubr.bf16.mxu0 0
    %554 = vmatmul.mubr.bf16.gmra.mrb[0].mxu0 %v322
    %v555 = vpop.f32.mrb[0].mxu0
    %v556 = vadd.f32 %v98, %v555
    %v557 = vpop.f32.mrb[0].mxu0
    %v558 = vpop.f32.mrb[0].mxu0
    %v559 = vadd.f32 %v98, %v558
    %v560 = vpop.f32.mrb[0].mxu0
    %561 = vmatprep.mubr.bf16.mxu0 0
    %562 = vmatmul.mubr.bf16.gmra.mrb[0].mxu0 %v325
    %v563 = vpop.f32.mrb[0].mxu0
    %v564 = vadd.f32 %v98, %v563
    %v565 = vpop.f32.mrb[0].mxu0
    %v566 = vpop.f32.mrb[0].mxu0
    %v567 = vadd.f32 %v98, %v566
    %v568 = vpop.f32.mrb[0].mxu0
    %569 = vmatprep.mubr.bf16.mxu0 0
    %570 = vmatmul.mubr.bf16.gmra.mrb[0].mxu0 %v328
    %v571 = vpop.f32.mrb[0].mxu0
    %v572 = vadd.f32 %v98, %v571
    %v573 = vpop.f32.mrb[0].mxu0
    %v574 = vpop.f32.mrb[0].mxu0
    %v575 = vadd.f32 %v98, %v574
    %v576 = vpop.f32.mrb[0].mxu0
    %577 = vmatprep.mubr.bf16.mxu0 0
    %578 = vmatmul.mubr.bf16.gmra.mrb[0].mxu0 %v331
    %v579 = vpop.f32.mrb[0].mxu0
    %v580 = vadd.f32 %v98, %v579
    %v581 = vpop.f32.mrb[0].mxu0
    %v582 = vpop.f32.mrb[0].mxu0
    %v583 = vadd.f32 %v98, %v582
    %v584 = vpop.f32.mrb[0].mxu0
    %585 = vmatprep.mubr.bf16.mxu0 0
    %586 = vmatmul.mubr.bf16.gmra.mrb[0].mxu0 %v334
    %v587 = vpop.f32.mrb[0].mxu0
    %v588 = vadd.f32 %v98, %v587
    %v589 = vpop.f32.mrb[0].mxu0
    %v590 = vpop.f32.mrb[0].mxu0
    %v591 = vadd.f32 %v98, %v590
    %v592 = vpop.f32.mrb[0].mxu0
    %593 = vmatprep.mubr.bf16.mxu0 0
    %594 = vmatmul.mubr.bf16.gmra.mrb[0].mxu0 %v337
    %v595 = vpop.f32.mrb[0].mxu0
    %v596 = vadd.f32 %v98, %v595
    %v597 = vpop.f32.mrb[0].mxu0
    %v598 = vpop.f32.mrb[0].mxu0
    %v599 = vadd.f32 %v98, %v598
    %v600 = vpop.f32.mrb[0].mxu0
    %601 = vmatprep.mubr.bf16.mxu0 0
    %602 = vmatmul.mubr.bf16.gmra.mrb[0].mxu0 %v340
    %v603 = vpop.f32.mrb[0].mxu0
    %v604 = vadd.f32 %v98, %v603
    %v605 = vpop.f32.mrb[0].mxu0
    %v606 = vpop.f32.mrb[0].mxu0
    %v607 = vadd.f32 %v98, %v606
    %v608 = vpop.f32.mrb[0].mxu0
    %609 = vmatprep.mubr.bf16.mxu0 0
    %610 = vmatmul.mubr.bf16.gmra.mrb[0].mxu0 %v343
    %v611 = vpop.f32.mrb[0].mxu0
    %v612 = vadd.f32 %v98, %v611
    %v613 = vpop.f32.mrb[0].mxu0
    %v614 = vpop.f32.mrb[0].mxu0
    %v615 = vadd.f32 %v98, %v614
    %v616 = vpop.f32.mrb[0].mxu0
    %617 = vmatprep.mubr.bf16.mxu0 0
    %618 = vmatmul.mubr.bf16.gmra.mrb[0].mxu0 %v346
    %v619 = vpop.f32.mrb[0].mxu0
    %v620 = vadd.f32 %v98, %v619
    %v621 = vpop.f32.mrb[0].mxu0
    %v622 = vpop.f32.mrb[0].mxu0
    %v623 = vadd.f32 %v98, %v622
    %v624 = vpop.f32.mrb[0].mxu0
    %625 = vmatprep.mubr.bf16.mxu0 0
    %626 = vmatmul.mubr.bf16.gmra.mrb[0].mxu0 %v349
    %v627 = vpop.f32.mrb[0].mxu0
    %v628 = vadd.f32 %v98, %v627
    %v629 = vpop.f32.mrb[0].mxu0
    %v630 = vpop.f32.mrb[0].mxu0
    %v631 = vadd.f32 %v98, %v630
    %v632 = vpop.f32.mrb[0].mxu0
    %633 = vmatprep.mubr.bf16.mxu0 0
    %634 = vmatmul.mubr.bf16.gmra.mrb[0].mxu0 %v352
    %v635 = vpop.f32.mrb[0].mxu0
    %v636 = vadd.f32 %v98, %v635
    %v637 = vpop.f32.mrb[0].mxu0
    %v638 = vpop.f32.mrb[0].mxu0
    %v639 = vadd.f32 %v98, %v638
    %v640 = vpop.f32.mrb[0].mxu0
    %641 = vmatprep.mubr.bf16.mxu0 0
    %642 = vmatmul.mubr.bf16.gmra.mrb[0].mxu0 %v355
    %v643 = vpop.f32.mrb[0].mxu0
    %v644 = vadd.f32 %v98, %v643
    %v645 = vpop.f32.mrb[0].mxu0
    %v646 = vpop.f32.mrb[0].mxu0
    %v647 = vadd.f32 %v98, %v646
    %v648 = vpop.f32.mrb[0].mxu0
    %649 = vdwg.mxu0
    %v650 = vmax.f32 %v396, 0.0
    %v651 = vmax.f32 %v399, 0.0
    %v652 = vmax.f32 %v404, 0.0
    %v653 = vmax.f32 %v407, 0.0
    %v654 = vmax.f32 %v412, 0.0
    %v655 = vmax.f32 %v415, 0.0
    %v656 = vmax.f32 %v420, 0.0
    %v657 = vmax.f32 %v423, 0.0
    %v658 = vmax.f32 %v428, 0.0
    %v659 = vmax.f32 %v431, 0.0
    %v660 = vmax.f32 %v436, 0.0
    %v661 = vmax.f32 %v439, 0.0
    %v662 = vmax.f32 %v444, 0.0
    %v663 = vmax.f32 %v447, 0.0
    %v664 = vmax.f32 %v452, 0.0
    %v665 = vmax.f32 %v455, 0.0
    %v666 = vmax.f32 %v460, 0.0
    %v667 = vmax.f32 %v463, 0.0
    %v668 = vmax.f32 %v468, 0.0
    %v669 = vmax.f32 %v471, 0.0
    %v670 = vmax.f32 %v476, 0.0
    %v671 = vmax.f32 %v479, 0.0
    %v672 = vmax.f32 %v484, 0.0
    %v673 = vmax.f32 %v487, 0.0
    %v674 = vmax.f32 %v492, 0.0
    %v675 = vmax.f32 %v495, 0.0
    %v676 = vmax.f32 %v500, 0.0
    %v677 = vmax.f32 %v503, 0.0
    %v678 = vmax.f32 %v508, 0.0
    %v679 = vmax.f32 %v511, 0.0
    %v680 = vmax.f32 %v516, 0.0
    %v681 = vmax.f32 %v519, 0.0
    %v682 = vmax.f32 %v524, 0.0
    %v683 = vmax.f32 %v527, 0.0
    %v684 = vmax.f32 %v532, 0.0
    %v685 = vmax.f32 %v535, 0.0
    %v686 = vmax.f32 %v540, 0.0
    %v687 = vmax.f32 %v543, 0.0
    %v688 = vmax.f32 %v548, 0.0
    %v689 = vmax.f32 %v551, 0.0
    %v690 = vmax.f32 %v556, 0.0
    %v691 = vmax.f32 %v559, 0.0
    %v692 = vmax.f32 %v564, 0.0
    %v693 = vmax.f32 %v567, 0.0
    %v694 = vmax.f32 %v572, 0.0
    %v695 = vmax.f32 %v575, 0.0
    %v696 = vmax.f32 %v580, 0.0
    %v697 = vmax.f32 %v583, 0.0
    %v698 = vmax.f32 %v588, 0.0
    %v699 = vmax.f32 %v591, 0.0
    %v700 = vmax.f32 %v596, 0.0
    %v701 = vmax.f32 %v599, 0.0
    %v702 = vmax.f32 %v604, 0.0
    %v703 = vmax.f32 %v607, 0.0
    %v704 = vmax.f32 %v612, 0.0
    %v705 = vmax.f32 %v615, 0.0
    %v706 = vmax.f32 %v620, 0.0
    %v707 = vmax.f32 %v623, 0.0
    %v708 = vmax.f32 %v628, 0.0
    %v709 = vmax.f32 %v631, 0.0
    %v710 = vmax.f32 %v636, 0.0
    %v711 = vmax.f32 %v639, 0.0
    %v712 = vmax.f32 %v644, 0.0
    %v713 = vmax.f32 %v647, 0.0
    %v714 = vpack.c.bf16 %v651, %v650
    %v715 = vpack.c.bf16 %v653, %v652
    %v716 = vpack.c.bf16 %v655, %v654
    %v717 = vpack.c.bf16 %v657, %v656
    %v718 = vpack.c.bf16 %v659, %v658
    %v719 = vpack.c.bf16 %v661, %v660
    %v720 = vpack.c.bf16 %v663, %v662
    %v721 = vpack.c.bf16 %v665, %v664
    %v722 = vpack.c.bf16 %v667, %v666
    %v723 = vpack.c.bf16 %v669, %v668
    %v724 = vpack.c.bf16 %v671, %v670
    %v725 = vpack.c.bf16 %v673, %v672
    %v726 = vpack.c.bf16 %v675, %v674
    %v727 = vpack.c.bf16 %v677, %v676
    %v728 = vpack.c.bf16 %v679, %v678
    %v729 = vpack.c.bf16 %v681, %v680
    %v730 = vpack.c.bf16 %v683, %v682
    %v731 = vpack.c.bf16 %v685, %v684
    %v732 = vpack.c.bf16 %v687, %v686
    %v733 = vpack.c.bf16 %v689, %v688
    %v734 = vpack.c.bf16 %v691, %v690
    %v735 = vpack.c.bf16 %v693, %v692
    %v736 = vpack.c.bf16 %v695, %v694
    %v737 = vpack.c.bf16 %v697, %v696
    %v738 = vpack.c.bf16 %v699, %v698
    %v739 = vpack.c.bf16 %v701, %v700
    %v740 = vpack.c.bf16 %v703, %v702
    %v741 = vpack.c.bf16 %v705, %v704
    %v742 = vpack.c.bf16 %v707, %v706
    %v743 = vpack.c.bf16 %v709, %v708
    %v744 = vpack.c.bf16 %v711, %v710
    %v745 = vpack.c.bf16 %v713, %v712
    %v746 = vld [vmem:[%s3] sm:$0xf]
    %v747 = vld [vmem:[%s3 + $0x4] sm:$0xf]
    %v748 = vld [vmem:[%s3 + $0x8] sm:$0xf]
    %v749 = vld [vmem:[%s3 + $0xc] sm:$0xf]
    %v750 = vld [vmem:[%s3 + $0x10] sm:$0xf]
    %v751 = vld [vmem:[%s3 + $0x14] sm:$0xf]
    %v752 = vld [vmem:[%s3 + $0x18] sm:$0xf]
    %v753 = vld [vmem:[%s3 + $0x1c] sm:$0xf]
    %v754 = vld [vmem:[%s3 + $0x20] sm:$0xf]
    %v755 = vld [vmem:[%s3 + $0x24] sm:$0xf]
    %v756 = vld [vmem:[%s3 + $0x28] sm:$0xf]
    %v757 = vld [vmem:[%s3 + $0x2c] sm:$0xf]
    %v758 = vld [vmem:[%s3 + $0x30] sm:$0xf]
    %v759 = vld [vmem:[%s3 + $0x34] sm:$0xf]
    %v760 = vld [vmem:[%s3 + $0x38] sm:$0xf]
    %v761 = vld [vmem:[%s3 + $0x3c] sm:$0xf]
    %v762 = vld [vmem:[%s4] sm:$0x1]
    %v764 = vlaneseq
    %v765 = vshrl.u32 %v764, 7
    %v766 = vsub.s32 0, %v765
    %v767 = vrot.slane %v762, %v766
    %v785 = vunpack.c.l.b16 %v746
    %v786 = vunpack.c.l.b16 %v747
    %v787 = vunpack.c.l.b16 %v748
    %v788 = vunpack.c.l.b16 %v749
    %v789 = vunpack.c.l.b16 %v750
    %v790 = vunpack.c.l.b16 %v751
    %v791 = vunpack.c.l.b16 %v752
    %v792 = vunpack.c.l.b16 %v753
    %v793 = vunpack.c.l.b16 %v754
    %v794 = vunpack.c.l.b16 %v755
    %v795 = vunpack.c.l.b16 %v756
    %v796 = vunpack.c.l.b16 %v757
    %v797 = vunpack.c.l.b16 %v758
    %v798 = vunpack.c.l.b16 %v759
    %v799 = vunpack.c.l.b16 %v760
    %v800 = vunpack.c.l.b16 %v761
    %v801 = vpack.c.b16 %v786, %v785
    %v802 = vpack.c.b16 %v788, %v787
    %v803 = vpack.c.b16 %v790, %v789
    %v804 = vpack.c.b16 %v792, %v791
    %v805 = vpack.c.b16 %v794, %v793
    %v806 = vpack.c.b16 %v796, %v795
    %v807 = vpack.c.b16 %v798, %v797
    %v808 = vpack.c.b16 %v800, %v799
    %817 = vmatprep.subr.bf16.mxu0 0
    %818 = vmatpush1.bf16.msra.mxu0 %v801
    %819 = vmatprep.subr.bf16.mxu0 0
    %820 = vmatpush1.bf16.msra.mxu0 %v802
    %821 = vmatprep.subr.bf16.mxu0 0
    %822 = vmatpush1.bf16.msra.mxu0 %v803
    %823 = vmatprep.subr.bf16.mxu0 0
    %824 = vmatpush1.bf16.msra.mxu0 %v804
    %825 = vmatprep.subr.bf16.mxu0 0
    %826 = vmatpush1.bf16.msra.mxu0 %v805
    %827 = vmatprep.subr.bf16.mxu0 0
    %828 = vmatpush1.bf16.msra.mxu0 %v806
    %829 = vmatprep.subr.bf16.mxu0 0
    %830 = vmatpush1.bf16.msra.mxu0 %v807
    %831 = vmatprep.subr.bf16.mxu0 0
    %832 = vmatpush1.bf16.msra.mxu0 %v808
    %833 = vmatprep.subr.bf16.mxu0 0
    %834 = vmatpush1.bf16.msra.mxu0 0
    %835 = vmatprep.subr.bf16.mxu0 0
    %836 = vmatpush1.bf16.msra.mxu0 0
    %837 = vmatprep.subr.bf16.mxu0 0
    %838 = vmatpush1.bf16.msra.mxu0 0
    %839 = vmatprep.subr.bf16.mxu0 0
    %840 = vmatpush1.bf16.msra.mxu0 0
    %841 = vmatprep.subr.bf16.mxu0 0
    %842 = vmatpush1.bf16.msra.mxu0 0
    %843 = vmatprep.subr.bf16.mxu0 0
    %844 = vmatpush1.bf16.msra.mxu0 0
    %845 = vmatprep.subr.bf16.mxu0 0
    %846 = vmatpush1.bf16.msra.mxu0 0
    %847 = vmatprep.subr.bf16.mxu0 0
    %848 = vmatpush1.bf16.msra.mxu0 0
    %849 = vmatprep.mubr.bf16.mxu0 0
    %850 = vmatmul.mubr.bf16.gmra.mrb[0].mxu0 %v714
    %v851 = vpop.f32.mrb[0].mxu0
    %v852 = vadd.f32 %v767, %v851
    %v853 = vpop.f32.mrb[0].mxu0
    %v854 = vpop.f32.mrb[0].mxu0
    %v855 = vadd.f32 %v767, %v854
    %v856 = vpop.f32.mrb[0].mxu0
    %857 = vmatprep.mubr.bf16.mxu0 0
    %858 = vmatmul.mubr.bf16.gmra.mrb[0].mxu0 %v715
    %v859 = vpop.f32.mrb[0].mxu0
    %v860 = vadd.f32 %v767, %v859
    %v861 = vpop.f32.mrb[0].mxu0
    %v862 = vpop.f32.mrb[0].mxu0
    %v863 = vadd.f32 %v767, %v862
    %v864 = vpop.f32.mrb[0].mxu0
    %865 = vmatprep.mubr.bf16.mxu0 0
    %866 = vmatmul.mubr.bf16.gmra.mrb[0].mxu0 %v716
    %v867 = vpop.f32.mrb[0].mxu0
    %v868 = vadd.f32 %v767, %v867
    %v869 = vpop.f32.mrb[0].mxu0
    %v870 = vpop.f32.mrb[0].mxu0
    %v871 = vadd.f32 %v767, %v870
    %v872 = vpop.f32.mrb[0].mxu0
    %873 = vmatprep.mubr.bf16.mxu0 0
    %874 = vmatmul.mubr.bf16.gmra.mrb[0].mxu0 %v717
    %v875 = vpop.f32.mrb[0].mxu0
    %v876 = vadd.f32 %v767, %v875
    %v877 = vpop.f32.mrb[0].mxu0
    %v878 = vpop.f32.mrb[0].mxu0
    %v879 = vadd.f32 %v767, %v878
    %v880 = vpop.f32.mrb[0].mxu0
    %881 = vmatprep.mubr.bf16.mxu0 0
    %882 = vmatmul.mubr.bf16.gmra.mrb[0].mxu0 %v718
    %v883 = vpop.f32.mrb[0].mxu0
    %v884 = vadd.f32 %v767, %v883
    %v885 = vpop.f32.mrb[0].mxu0
    %v886 = vpop.f32.mrb[0].mxu0
    %v887 = vadd.f32 %v767, %v886
    %v888 = vpop.f32.mrb[0].mxu0
    %889 = vmatprep.mubr.bf16.mxu0 0
    %890 = vmatmul.mubr.bf16.gmra.mrb[0].mxu0 %v719
    %v891 = vpop.f32.mrb[0].mxu0
    %v892 = vadd.f32 %v767, %v891
    %v893 = vpop.f32.mrb[0].mxu0
    %v894 = vpop.f32.mrb[0].mxu0
    %v895 = vadd.f32 %v767, %v894
    %v896 = vpop.f32.mrb[0].mxu0
    %897 = vmatprep.mubr.bf16.mxu0 0
    %898 = vmatmul.mubr.bf16.gmra.mrb[0].mxu0 %v720
    %v899 = vpop.f32.mrb[0].mxu0
    %v900 = vadd.f32 %v767, %v899
    %v901 = vpop.f32.mrb[0].mxu0
    %v902 = vpop.f32.mrb[0].mxu0
    %v903 = vadd.f32 %v767, %v902
    %v904 = vpop.f32.mrb[0].mxu0
    %905 = vmatprep.mubr.bf16.mxu0 0
    %906 = vmatmul.mubr.bf16.gmra.mrb[0].mxu0 %v721
    %v907 = vpop.f32.mrb[0].mxu0
    %v908 = vadd.f32 %v767, %v907
    %v909 = vpop.f32.mrb[0].mxu0
    %v910 = vpop.f32.mrb[0].mxu0
    %v911 = vadd.f32 %v767, %v910
    %v912 = vpop.f32.mrb[0].mxu0
    %913 = vmatprep.mubr.bf16.mxu0 0
    %914 = vmatmul.mubr.bf16.gmra.mrb[0].mxu0 %v722
    %v915 = vpop.f32.mrb[0].mxu0
    %v916 = vadd.f32 %v767, %v915
    %v917 = vpop.f32.mrb[0].mxu0
    %v918 = vpop.f32.mrb[0].mxu0
    %v919 = vadd.f32 %v767, %v918
    %v920 = vpop.f32.mrb[0].mxu0
    %921 = vmatprep.mubr.bf16.mxu0 0
    %922 = vmatmul.mubr.bf16.gmra.mrb[0].mxu0 %v723
    %v923 = vpop.f32.mrb[0].mxu0
    %v924 = vadd.f32 %v767, %v923
    %v925 = vpop.f32.mrb[0].mxu0
    %v926 = vpop.f32.mrb[0].mxu0
    %v927 = vadd.f32 %v767, %v926
    %v928 = vpop.f32.mrb[0].mxu0
    %929 = vmatprep.mubr.bf16.mxu0 0
    %930 = vmatmul.mubr.bf16.gmra.mrb[0].mxu0 %v724
    %v931 = vpop.f32.mrb[0].mxu0
    %v932 = vadd.f32 %v767, %v931
    %v933 = vpop.f32.mrb[0].mxu0
    %v934 = vpop.f32.mrb[0].mxu0
    %v935 = vadd.f32 %v767, %v934
    %v936 = vpop.f32.mrb[0].mxu0
    %937 = vmatprep.mubr.bf16.mxu0 0
    %938 = vmatmul.mubr.bf16.gmra.mrb[0].mxu0 %v725
    %v939 = vpop.f32.mrb[0].mxu0
    %v940 = vadd.f32 %v767, %v939
    %v941 = vpop.f32.mrb[0].mxu0
    %v942 = vpop.f32.mrb[0].mxu0
    %v943 = vadd.f32 %v767, %v942
    %v944 = vpop.f32.mrb[0].mxu0
    %945 = vmatprep.mubr.bf16.mxu0 0
    %946 = vmatmul.mubr.bf16.gmra.mrb[0].mxu0 %v726
    %v947 = vpop.f32.mrb[0].mxu0
    %v948 = vadd.f32 %v767, %v947
    %v949 = vpop.f32.mrb[0].mxu0
    %v950 = vpop.f32.mrb[0].mxu0
    %v951 = vadd.f32 %v767, %v950
    %v952 = vpop.f32.mrb[0].mxu0
    %953 = vmatprep.mubr.bf16.mxu0 0
    %954 = vmatmul.mubr.bf16.gmra.mrb[0].mxu0 %v727
    %v955 = vpop.f32.mrb[0].mxu0
    %v956 = vadd.f32 %v767, %v955
    %v957 = vpop.f32.mrb[0].mxu0
    %v958 = vpop.f32.mrb[0].mxu0
    %v959 = vadd.f32 %v767, %v958
    %v960 = vpop.f32.mrb[0].mxu0
    %961 = vmatprep.mubr.bf16.mxu0 0
    %962 = vmatmul.mubr.bf16.gmra.mrb[0].mxu0 %v728
    %v963 = vpop.f32.mrb[0].mxu0
    %v964 = vadd.f32 %v767, %v963
    %v965 = vpop.f32.mrb[0].mxu0
    %v966 = vpop.f32.mrb[0].mxu0
    %v967 = vadd.f32 %v767, %v966
    %v968 = vpop.f32.mrb[0].mxu0
    %969 = vmatprep.mubr.bf16.mxu0 0
    %970 = vmatmul.mubr.bf16.gmra.mrb[0].mxu0 %v729
    %v971 = vpop.f32.mrb[0].mxu0
    %v972 = vadd.f32 %v767, %v971
    %v973 = vpop.f32.mrb[0].mxu0
    %v974 = vpop.f32.mrb[0].mxu0
    %v975 = vadd.f32 %v767, %v974
    %v976 = vpop.f32.mrb[0].mxu0
    %977 = vmatprep.mubr.bf16.mxu0 0
    %978 = vmatmul.mubr.bf16.gmra.mrb[0].mxu0 %v730
    %v979 = vpop.f32.mrb[0].mxu0
    %v980 = vadd.f32 %v767, %v979
    %v981 = vpop.f32.mrb[0].mxu0
    %v982 = vpop.f32.mrb[0].mxu0
    %v983 = vadd.f32 %v767, %v982
    %v984 = vpop.f32.mrb[0].mxu0
    %985 = vmatprep.mubr.bf16.mxu0 0
    %986 = vmatmul.mubr.bf16.gmra.mrb[0].mxu0 %v731
    %v987 = vpop.f32.mrb[0].mxu0
    %v988 = vadd.f32 %v767, %v987
    %v989 = vpop.f32.mrb[0].mxu0
    %v990 = vpop.f32.mrb[0].mxu0
    %v991 = vadd.f32 %v767, %v990
    %v992 = vpop.f32.mrb[0].mxu0
    %993 = vmatprep.mubr.bf16.mxu0 0
    %994 = vmatmul.mubr.bf16.gmra.mrb[0].mxu0 %v732
    %v995 = vpop.f32.mrb[0].mxu0
    %v996 = vadd.f32 %v767, %v995
    %v997 = vpop.f32.mrb[0].mxu0
    %v998 = vpop.f32.mrb[0].mxu0
    %v999 = vadd.f32 %v767, %v998
    %v1000 = vpop.f32.mrb[0].mxu0
    %1001 = vmatprep.mubr.bf16.mxu0 0
    %1002 = vmatmul.mubr.bf16.gmra.mrb[0].mxu0 %v733
    %v1003 = vpop.f32.mrb[0].mxu0
    %v1004 = vadd.f32 %v767, %v1003
    %v1005 = vpop.f32.mrb[0].mxu0
    %v1006 = vpop.f32.mrb[0].mxu0
    %v1007 = vadd.f32 %v767, %v1006
    %v1008 = vpop.f32.mrb[0].mxu0
    %1009 = vmatprep.mubr.bf16.mxu0 0
    %1010 = vmatmul.mubr.bf16.gmra.mrb[0].mxu0 %v734
    %v1011 = vpop.f32.mrb[0].mxu0
    %v1012 = vadd.f32 %v767, %v1011
    %v1013 = vpop.f32.mrb[0].mxu0
    %v1014 = vpop.f32.mrb[0].mxu0
    %v1015 = vadd.f32 %v767, %v1014
    %v1016 = vpop.f32.mrb[0].mxu0
    %1017 = vmatprep.mubr.bf16.mxu0 0
    %1018 = vmatmul.mubr.bf16.gmra.mrb[0].mxu0 %v735
    %v1019 = vpop.f32.mrb[0].mxu0
    %v1020 = vadd.f32 %v767, %v1019
    %v1021 = vpop.f32.mrb[0].mxu0
    %v1022 = vpop.f32.mrb[0].mxu0
    %v1023 = vadd.f32 %v767, %v1022
    %v1024 = vpop.f32.mrb[0].mxu0
    %1025 = vmatprep.mubr.bf16.mxu0 0
    %1026 = vmatmul.mubr.bf16.gmra.mrb[0].mxu0 %v736
    %v1027 = vpop.f32.mrb[0].mxu0
    %v1028 = vadd.f32 %v767, %v1027
    %v1029 = vpop.f32.mrb[0].mxu0
    %v1030 = vpop.f32.mrb[0].mxu0
    %v1031 = vadd.f32 %v767, %v1030
    %v1032 = vpop.f32.mrb[0].mxu0
    %1033 = vmatprep.mubr.bf16.mxu0 0
    %1034 = vmatmul.mubr.bf16.gmra.mrb[0].mxu0 %v737
    %v1035 = vpop.f32.mrb[0].mxu0
    %v1036 = vadd.f32 %v767, %v1035
    %v1037 = vpop.f32.mrb[0].mxu0
    %v1038 = vpop.f32.mrb[0].mxu0
    %v1039 = vadd.f32 %v767, %v1038
    %v1040 = vpop.f32.mrb[0].mxu0
    %1041 = vmatprep.mubr.bf16.mxu0 0
    %1042 = vmatmul.mubr.bf16.gmra.mrb[0].mxu0 %v738
    %v1043 = vpop.f32.mrb[0].mxu0
    %v1044 = vadd.f32 %v767, %v1043
    %v1045 = vpop.f32.mrb[0].mxu0
    %v1046 = vpop.f32.mrb[0].mxu0
    %v1047 = vadd.f32 %v767, %v1046
    %v1048 = vpop.f32.mrb[0].mxu0
    %1049 = vmatprep.mubr.bf16.mxu0 0
    %1050 = vmatmul.mubr.bf16.gmra.mrb[0].mxu0 %v739
    %v1051 = vpop.f32.mrb[0].mxu0
    %v1052 = vadd.f32 %v767, %v1051
    %v1053 = vpop.f32.mrb[0].mxu0
    %v1054 = vpop.f32.mrb[0].mxu0
    %v1055 = vadd.f32 %v767, %v1054
    %v1056 = vpop.f32.mrb[0].mxu0
    %1057 = vmatprep.mubr.bf16.mxu0 0
    %1058 = vmatmul.mubr.bf16.gmra.mrb[0].mxu0 %v740
    %v1059 = vpop.f32.mrb[0].mxu0
    %v1060 = vadd.f32 %v767, %v1059
    %v1061 = vpop.f32.mrb[0].mxu0
    %v1062 = vpop.f32.mrb[0].mxu0
    %v1063 = vadd.f32 %v767, %v1062
    %v1064 = vpop.f32.mrb[0].mxu0
    %1065 = vmatprep.mubr.bf16.mxu0 0
    %1066 = vmatmul.mubr.bf16.gmra.mrb[0].mxu0 %v741
    %v1067 = vpop.f32.mrb[0].mxu0
    %v1068 = vadd.f32 %v767, %v1067
    %v1069 = vpop.f32.mrb[0].mxu0
    %v1070 = vpop.f32.mrb[0].mxu0
    %v1071 = vadd.f32 %v767, %v1070
    %v1072 = vpop.f32.mrb[0].mxu0
    %1073 = vmatprep.mubr.bf16.mxu0 0
    %1074 = vmatmul.mubr.bf16.gmra.mrb[0].mxu0 %v742
    %v1075 = vpop.f32.mrb[0].mxu0
    %v1076 = vadd.f32 %v767, %v1075
    %v1077 = vpop.f32.mrb[0].mxu0
    %v1078 = vpop.f32.mrb[0].mxu0
    %v1079 = vadd.f32 %v767, %v1078
    %v1080 = vpop.f32.mrb[0].mxu0
    %1081 = vmatprep.mubr.bf16.mxu0 0
    %1082 = vmatmul.mubr.bf16.gmra.mrb[0].mxu0 %v743
    %v1083 = vpop.f32.mrb[0].mxu0
    %v1084 = vadd.f32 %v767, %v1083
    %v1085 = vpop.f32.mrb[0].mxu0
    %v1086 = vpop.f32.mrb[0].mxu0
    %v1087 = vadd.f32 %v767, %v1086
    %v1088 = vpop.f32.mrb[0].mxu0
    %1089 = vmatprep.mubr.bf16.mxu0 0
    %1090 = vmatmul.mubr.bf16.gmra.mrb[0].mxu0 %v744
    %v1091 = vpop.f32.mrb[0].mxu0
    %v1092 = vadd.f32 %v767, %v1091
    %v1093 = vpop.f32.mrb[0].mxu0
    %v1094 = vpop.f32.mrb[0].mxu0
    %v1095 = vadd.f32 %v767, %v1094
    %v1096 = vpop.f32.mrb[0].mxu0
    %1097 = vmatprep.mubr.bf16.mxu0 0
    %1098 = vmatmul.mubr.bf16.gmra.mrb[0].mxu0 %v745
    %v1099 = vpop.f32.mrb[0].mxu0
    %v1100 = vadd.f32 %v767, %v1099
    %v1101 = vpop.f32.mrb[0].mxu0
    %v1102 = vpop.f32.mrb[0].mxu0
    %v1103 = vadd.f32 %v767, %v1102
    %v1104 = vpop.f32.mrb[0].mxu0
    %1105 = vdwg.mxu0
    %v1106 = vmax.f32 %v852, 0.0
    %v1107 = vmax.f32 %v855, 0.0
    %v1108 = vmax.f32 %v860, 0.0
    %v1109 = vmax.f32 %v863, 0.0
    %v1110 = vmax.f32 %v868, 0.0
    %v1111 = vmax.f32 %v871, 0.0
    %v1112 = vmax.f32 %v876, 0.0
    %v1113 = vmax.f32 %v879, 0.0
    %v1114 = vmax.f32 %v884, 0.0
    %v1115 = vmax.f32 %v887, 0.0
    %v1116 = vmax.f32 %v892, 0.0
    %v1117 = vmax.f32 %v895, 0.0
    %v1118 = vmax.f32 %v900, 0.0
    %v1119 = vmax.f32 %v903, 0.0
    %v1120 = vmax.f32 %v908, 0.0
    %v1121 = vmax.f32 %v911, 0.0
    %v1122 = vmax.f32 %v916, 0.0
    %v1123 = vmax.f32 %v919, 0.0
    %v1124 = vmax.f32 %v924, 0.0
    %v1125 = vmax.f32 %v927, 0.0
    %v1126 = vmax.f32 %v932, 0.0
    %v1127 = vmax.f32 %v935, 0.0
    %v1128 = vmax.f32 %v940, 0.0
    %v1129 = vmax.f32 %v943, 0.0
    %v1130 = vmax.f32 %v948, 0.0
    %v1131 = vmax.f32 %v951, 0.0
    %v1132 = vmax.f32 %v956, 0.0
    %v1133 = vmax.f32 %v959, 0.0
    %v1134 = vmax.f32 %v964, 0.0
    %v1135 = vmax.f32 %v967, 0.0
    %v1136 = vmax.f32 %v972, 0.0
    %v1137 = vmax.f32 %v975, 0.0
    %v1138 = vmax.f32 %v980, 0.0
    %v1139 = vmax.f32 %v983, 0.0
    %v1140 = vmax.f32 %v988, 0.0
    %v1141 = vmax.f32 %v991, 0.0
    %v1142 = vmax.f32 %v996, 0.0
    %v1143 = vmax.f32 %v999, 0.0
    %v1144 = vmax.f32 %v1004, 0.0
    %v1145 = vmax.f32 %v1007, 0.0
    %v1146 = vmax.f32 %v1012, 0.0
    %v1147 = vmax.f32 %v1015, 0.0
    %v1148 = vmax.f32 %v1020, 0.0
    %v1149 = vmax.f32 %v1023, 0.0
    %v1150 = vmax.f32 %v1028, 0.0
    %v1151 = vmax.f32 %v1031, 0.0
    %v1152 = vmax.f32 %v1036, 0.0
    %v1153 = vmax.f32 %v1039, 0.0
    %v1154 = vmax.f32 %v1044, 0.0
    %v1155 = vmax.f32 %v1047, 0.0
    %v1156 = vmax.f32 %v1052, 0.0
    %v1157 = vmax.f32 %v1055, 0.0
    %v1158 = vmax.f32 %v1060, 0.0
    %v1159 = vmax.f32 %v1063, 0.0
    %v1160 = vmax.f32 %v1068, 0.0
    %v1161 = vmax.f32 %v1071, 0.0
    %v1162 = vmax.f32 %v1076, 0.0
    %v1163 = vmax.f32 %v1079, 0.0
    %v1164 = vmax.f32 %v1084, 0.0
    %v1165 = vmax.f32 %v1087, 0.0
    %v1166 = vmax.f32 %v1092, 0.0
    %v1167 = vmax.f32 %v1095, 0.0
    %v1168 = vmax.f32 %v1100, 0.0
    %v1169 = vmax.f32 %v1103, 0.0
    %v1170 = vpack.c.bf16 %v1107, %v1106
    %v1171 = vpack.c.bf16 %v1109, %v1108
    %v1172 = vpack.c.bf16 %v1111, %v1110
    %v1173 = vpack.c.bf16 %v1113, %v1112
    %v1174 = vpack.c.bf16 %v1115, %v1114
    %v1175 = vpack.c.bf16 %v1117, %v1116
    %v1176 = vpack.c.bf16 %v1119, %v1118
    %v1177 = vpack.c.bf16 %v1121, %v1120
    %v1178 = vpack.c.bf16 %v1123, %v1122
    %v1179 = vpack.c.bf16 %v1125, %v1124
    %v1180 = vpack.c.bf16 %v1127, %v1126
    %v1181 = vpack.c.bf16 %v1129, %v1128
    %v1182 = vpack.c.bf16 %v1131, %v1130
    %v1183 = vpack.c.bf16 %v1133, %v1132
    %v1184 = vpack.c.bf16 %v1135, %v1134
    %v1185 = vpack.c.bf16 %v1137, %v1136
    %v1186 = vpack.c.bf16 %v1139, %v1138
    %v1187 = vpack.c.bf16 %v1141, %v1140
    %v1188 = vpack.c.bf16 %v1143, %v1142
    %v1189 = vpack.c.bf16 %v1145, %v1144
    %v1190 = vpack.c.bf16 %v1147, %v1146
    %v1191 = vpack.c.bf16 %v1149, %v1148
    %v1192 = vpack.c.bf16 %v1151, %v1150
    %v1193 = vpack.c.bf16 %v1153, %v1152
    %v1194 = vpack.c.bf16 %v1155, %v1154
    %v1195 = vpack.c.bf16 %v1157, %v1156
    %v1196 = vpack.c.bf16 %v1159, %v1158
    %v1197 = vpack.c.bf16 %v1161, %v1160
    %v1198 = vpack.c.bf16 %v1163, %v1162
    %v1199 = vpack.c.bf16 %v1165, %v1164
    %v1200 = vpack.c.bf16 %v1167, %v1166
    %v1201 = vpack.c.bf16 %v1169, %v1168
    %v1202 = vld [vmem:[%s5] sm:$0xf]
    %v1203 = vld [vmem:[%s5 + $0x4] sm:$0xf]
    %v1204 = vld [vmem:[%s5 + $0x8] sm:$0xf]
    %v1205 = vld [vmem:[%s5 + $0xc] sm:$0xf]
    %v1206 = vld [vmem:[%s5 + $0x10] sm:$0xf]
    %v1207 = vld [vmem:[%s5 + $0x14] sm:$0xf]
    %v1208 = vld [vmem:[%s5 + $0x18] sm:$0xf]
    %v1209 = vld [vmem:[%s5 + $0x1c] sm:$0xf]
    %v1210 = vld [vmem:[%s5 + $0x20] sm:$0xf]
    %v1211 = vld [vmem:[%s5 + $0x24] sm:$0xf]
    %v1212 = vld [vmem:[%s5 + $0x28] sm:$0xf]
    %v1213 = vld [vmem:[%s5 + $0x2c] sm:$0xf]
    %v1214 = vld [vmem:[%s5 + $0x30] sm:$0xf]
    %v1215 = vld [vmem:[%s5 + $0x34] sm:$0xf]
    %v1216 = vld [vmem:[%s5 + $0x38] sm:$0xf]
    %v1217 = vld [vmem:[%s5 + $0x3c] sm:$0xf]
    %v1218 = vld [vmem:[%s6] sm:$0x1]
    %v1220 = vlaneseq
    %v1221 = vshrl.u32 %v1220, 7
    %v1222 = vsub.s32 0, %v1221
    %v1223 = vrot.slane %v1218, %v1222
    %v1241 = vunpack.c.l.b16 %v1202
    %v1242 = vunpack.c.l.b16 %v1203
    %v1243 = vunpack.c.l.b16 %v1204
    %v1244 = vunpack.c.l.b16 %v1205
    %v1245 = vunpack.c.l.b16 %v1206
    %v1246 = vunpack.c.l.b16 %v1207
    %v1247 = vunpack.c.l.b16 %v1208
    %v1248 = vunpack.c.l.b16 %v1209
    %v1249 = vunpack.c.l.b16 %v1210
    %v1250 = vunpack.c.l.b16 %v1211
    %v1251 = vunpack.c.l.b16 %v1212
    %v1252 = vunpack.c.l.b16 %v1213
    %v1253 = vunpack.c.l.b16 %v1214
    %v1254 = vunpack.c.l.b16 %v1215
    %v1255 = vunpack.c.l.b16 %v1216
    %v1256 = vunpack.c.l.b16 %v1217
    %v1257 = vpack.c.b16 %v1242, %v1241
    %v1258 = vpack.c.b16 %v1244, %v1243
    %v1259 = vpack.c.b16 %v1246, %v1245
    %v1260 = vpack.c.b16 %v1248, %v1247
    %v1261 = vpack.c.b16 %v1250, %v1249
    %v1262 = vpack.c.b16 %v1252, %v1251
    %v1263 = vpack.c.b16 %v1254, %v1253
    %v1264 = vpack.c.b16 %v1256, %v1255
    %1273 = vmatprep.subr.bf16.mxu0 0
    %1274 = vmatpush1.bf16.msra.mxu0 %v1257
    %1275 = vmatprep.subr.bf16.mxu0 0
    %1276 = vmatpush1.bf16.msra.mxu0 %v1258
    %1277 = vmatprep.subr.bf16.mxu0 0
    %1278 = vmatpush1.bf16.msra.mxu0 %v1259
    %1279 = vmatprep.subr.bf16.mxu0 0
    %1280 = vmatpush1.bf16.msra.mxu0 %v1260
    %1281 = vmatprep.subr.bf16.mxu0 0
    %1282 = vmatpush1.bf16.msra.mxu0 %v1261
    %1283 = vmatprep.subr.bf16.mxu0 0
    %1284 = vmatpush1.bf16.msra.mxu0 %v1262
    %1285 = vmatprep.subr.bf16.mxu0 0
    %1286 = vmatpush1.bf16.msra.mxu0 %v1263
    %1287 = vmatprep.subr.bf16.mxu0 0
    %1288 = vmatpush1.bf16.msra.mxu0 %v1264
    %1289 = vmatprep.subr.bf16.mxu0 0
    %1290 = vmatpush1.bf16.msra.mxu0 0
    %1291 = vmatprep.subr.bf16.mxu0 0
    %1292 = vmatpush1.bf16.msra.mxu0 0
    %1293 = vmatprep.subr.bf16.mxu0 0
    %1294 = vmatpush1.bf16.msra.mxu0 0
    %1295 = vmatprep.subr.bf16.mxu0 0
    %1296 = vmatpush1.bf16.msra.mxu0 0
    %1297 = vmatprep.subr.bf16.mxu0 0
    %1298 = vmatpush1.bf16.msra.mxu0 0
    %1299 = vmatprep.subr.bf16.mxu0 0
    %1300 = vmatpush1.bf16.msra.mxu0 0
    %1301 = vmatprep.subr.bf16.mxu0 0
    %1302 = vmatpush1.bf16.msra.mxu0 0
    %1303 = vmatprep.subr.bf16.mxu0 0
    %1304 = vmatpush1.bf16.msra.mxu0 0
    %1305 = vmatprep.mubr.bf16.mxu0 0
    %1306 = vmatmul.mubr.bf16.gmra.mrb[0].mxu0 %v1170
    %v1307 = vpop.f32.mrb[0].mxu0
    %v1308 = vadd.f32 %v1223, %v1307
    %v1309 = vpop.f32.mrb[0].mxu0
    %v1310 = vpop.f32.mrb[0].mxu0
    %v1311 = vadd.f32 %v1223, %v1310
    %v1312 = vpop.f32.mrb[0].mxu0
    %1313 = vmatprep.mubr.bf16.mxu0 0
    %1314 = vmatmul.mubr.bf16.gmra.mrb[0].mxu0 %v1171
    %v1315 = vpop.f32.mrb[0].mxu0
    %v1316 = vadd.f32 %v1223, %v1315
    %v1317 = vpop.f32.mrb[0].mxu0
    %v1318 = vpop.f32.mrb[0].mxu0
    %v1319 = vadd.f32 %v1223, %v1318
    %v1320 = vpop.f32.mrb[0].mxu0
    %1321 = vmatprep.mubr.bf16.mxu0 0
    %1322 = vmatmul.mubr.bf16.gmra.mrb[0].mxu0 %v1172
    %v1323 = vpop.f32.mrb[0].mxu0
    %v1324 = vadd.f32 %v1223, %v1323
    %v1325 = vpop.f32.mrb[0].mxu0
    %v1326 = vpop.f32.mrb[0].mxu0
    %v1327 = vadd.f32 %v1223, %v1326
    %v1328 = vpop.f32.mrb[0].mxu0
    %1329 = vmatprep.mubr.bf16.mxu0 0
    %1330 = vmatmul.mubr.bf16.gmra.mrb[0].mxu0 %v1173
    %v1331 = vpop.f32.mrb[0].mxu0
    %v1332 = vadd.f32 %v1223, %v1331
    %v1333 = vpop.f32.mrb[0].mxu0
    %v1334 = vpop.f32.mrb[0].mxu0
    %v1335 = vadd.f32 %v1223, %v1334
    %v1336 = vpop.f32.mrb[0].mxu0
    %1337 = vmatprep.mubr.bf16.mxu0 0
    %1338 = vmatmul.mubr.bf16.gmra.mrb[0].mxu0 %v1174
    %v1339 = vpop.f32.mrb[0].mxu0
    %v1340 = vadd.f32 %v1223, %v1339
    %v1341 = vpop.f32.mrb[0].mxu0
    %v1342 = vpop.f32.mrb[0].mxu0
    %v1343 = vadd.f32 %v1223, %v1342
    %v1344 = vpop.f32.mrb[0].mxu0
    %1345 = vmatprep.mubr.bf16.mxu0 0
    %1346 = vmatmul.mubr.bf16.gmra.mrb[0].mxu0 %v1175
    %v1347 = vpop.f32.mrb[0].mxu0
    %v1348 = vadd.f32 %v1223, %v1347
    %v1349 = vpop.f32.mrb[0].mxu0
    %v1350 = vpop.f32.mrb[0].mxu0
    %v1351 = vadd.f32 %v1223, %v1350
    %v1352 = vpop.f32.mrb[0].mxu0
    %1353 = vmatprep.mubr.bf16.mxu0 0
    %1354 = vmatmul.mubr.bf16.gmra.mrb[0].mxu0 %v1176
    %v1355 = vpop.f32.mrb[0].mxu0
    %v1356 = vadd.f32 %v1223, %v1355
    %v1357 = vpop.f32.mrb[0].mxu0
    %v1358 = vpop.f32.mrb[0].mxu0
    %v1359 = vadd.f32 %v1223, %v1358
    %v1360 = vpop.f32.mrb[0].mxu0
    %1361 = vmatprep.mubr.bf16.mxu0 0
    %1362 = vmatmul.mubr.bf16.gmra.mrb[0].mxu0 %v1177
    %v1363 = vpop.f32.mrb[0].mxu0
    %v1364 = vadd.f32 %v1223, %v1363
    %v1365 = vpop.f32.mrb[0].mxu0
    %v1366 = vpop.f32.mrb[0].mxu0
    %v1367 = vadd.f32 %v1223, %v1366
    %v1368 = vpop.f32.mrb[0].mxu0
    %1369 = vmatprep.mubr.bf16.mxu0 0
    %1370 = vmatmul.mubr.bf16.gmra.mrb[0].mxu0 %v1178
    %v1371 = vpop.f32.mrb[0].mxu0
    %v1372 = vadd.f32 %v1223, %v1371
    %v1373 = vpop.f32.mrb[0].mxu0
    %v1374 = vpop.f32.mrb[0].mxu0
    %v1375 = vadd.f32 %v1223, %v1374
    %v1376 = vpop.f32.mrb[0].mxu0
    %1377 = vmatprep.mubr.bf16.mxu0 0
    %1378 = vmatmul.mubr.bf16.gmra.mrb[0].mxu0 %v1179
    %v1379 = vpop.f32.mrb[0].mxu0
    %v1380 = vadd.f32 %v1223, %v1379
    %v1381 = vpop.f32.mrb[0].mxu0
    %v1382 = vpop.f32.mrb[0].mxu0
    %v1383 = vadd.f32 %v1223, %v1382
    %v1384 = vpop.f32.mrb[0].mxu0
    %1385 = vmatprep.mubr.bf16.mxu0 0
    %1386 = vmatmul.mubr.bf16.gmra.mrb[0].mxu0 %v1180
    %v1387 = vpop.f32.mrb[0].mxu0
    %v1388 = vadd.f32 %v1223, %v1387
    %v1389 = vpop.f32.mrb[0].mxu0
    %v1390 = vpop.f32.mrb[0].mxu0
    %v1391 = vadd.f32 %v1223, %v1390
    %v1392 = vpop.f32.mrb[0].mxu0
    %1393 = vmatprep.mubr.bf16.mxu0 0
    %1394 = vmatmul.mubr.bf16.gmra.mrb[0].mxu0 %v1181
    %v1395 = vpop.f32.mrb[0].mxu0
    %v1396 = vadd.f32 %v1223, %v1395
    %v1397 = vpop.f32.mrb[0].mxu0
    %v1398 = vpop.f32.mrb[0].mxu0
    %v1399 = vadd.f32 %v1223, %v1398
    %v1400 = vpop.f32.mrb[0].mxu0
    %1401 = vmatprep.mubr.bf16.mxu0 0
    %1402 = vmatmul.mubr.bf16.gmra.mrb[0].mxu0 %v1182
    %v1403 = vpop.f32.mrb[0].mxu0
    %v1404 = vadd.f32 %v1223, %v1403
    %v1405 = vpop.f32.mrb[0].mxu0
    %v1406 = vpop.f32.mrb[0].mxu0
    %v1407 = vadd.f32 %v1223, %v1406
    %v1408 = vpop.f32.mrb[0].mxu0
    %1409 = vmatprep.mubr.bf16.mxu0 0
    %1410 = vmatmul.mubr.bf16.gmra.mrb[0].mxu0 %v1183
    %v1411 = vpop.f32.mrb[0].mxu0
    %v1412 = vadd.f32 %v1223, %v1411
    %v1413 = vpop.f32.mrb[0].mxu0
    %v1414 = vpop.f32.mrb[0].mxu0
    %v1415 = vadd.f32 %v1223, %v1414
    %v1416 = vpop.f32.mrb[0].mxu0
    %1417 = vmatprep.mubr.bf16.mxu0 0
    %1418 = vmatmul.mubr.bf16.gmra.mrb[0].mxu0 %v1184
    %v1419 = vpop.f32.mrb[0].mxu0
    %v1420 = vadd.f32 %v1223, %v1419
    %v1421 = vpop.f32.mrb[0].mxu0
    %v1422 = vpop.f32.mrb[0].mxu0
    %v1423 = vadd.f32 %v1223, %v1422
    %v1424 = vpop.f32.mrb[0].mxu0
    %1425 = vmatprep.mubr.bf16.mxu0 0
    %1426 = vmatmul.mubr.bf16.gmra.mrb[0].mxu0 %v1185
    %v1427 = vpop.f32.mrb[0].mxu0
    %v1428 = vadd.f32 %v1223, %v1427
    %v1429 = vpop.f32.mrb[0].mxu0
    %v1430 = vpop.f32.mrb[0].mxu0
    %v1431 = vadd.f32 %v1223, %v1430
    %v1432 = vpop.f32.mrb[0].mxu0
    %1433 = vmatprep.mubr.bf16.mxu0 0
    %1434 = vmatmul.mubr.bf16.gmra.mrb[0].mxu0 %v1186
    %v1435 = vpop.f32.mrb[0].mxu0
    %v1436 = vadd.f32 %v1223, %v1435
    %v1437 = vpop.f32.mrb[0].mxu0
    %v1438 = vpop.f32.mrb[0].mxu0
    %v1439 = vadd.f32 %v1223, %v1438
    %v1440 = vpop.f32.mrb[0].mxu0
    %1441 = vmatprep.mubr.bf16.mxu0 0
    %1442 = vmatmul.mubr.bf16.gmra.mrb[0].mxu0 %v1187
    %v1443 = vpop.f32.mrb[0].mxu0
    %v1444 = vadd.f32 %v1223, %v1443
    %v1445 = vpop.f32.mrb[0].mxu0
    %v1446 = vpop.f32.mrb[0].mxu0
    %v1447 = vadd.f32 %v1223, %v1446
    %v1448 = vpop.f32.mrb[0].mxu0
    %1449 = vmatprep.mubr.bf16.mxu0 0
    %1450 = vmatmul.mubr.bf16.gmra.mrb[0].mxu0 %v1188
    %v1451 = vpop.f32.mrb[0].mxu0
    %v1452 = vadd.f32 %v1223, %v1451
    %v1453 = vpop.f32.mrb[0].mxu0
    %v1454 = vpop.f32.mrb[0].mxu0
    %v1455 = vadd.f32 %v1223, %v1454
    %v1456 = vpop.f32.mrb[0].mxu0
    %1457 = vmatprep.mubr.bf16.mxu0 0
    %1458 = vmatmul.mubr.bf16.gmra.mrb[0].mxu0 %v1189
    %v1459 = vpop.f32.mrb[0].mxu0
    %v1460 = vadd.f32 %v1223, %v1459
    %v1461 = vpop.f32.mrb[0].mxu0
    %v1462 = vpop.f32.mrb[0].mxu0
    %v1463 = vadd.f32 %v1223, %v1462
    %v1464 = vpop.f32.mrb[0].mxu0
    %1465 = vmatprep.mubr.bf16.mxu0 0
    %1466 = vmatmul.mubr.bf16.gmra.mrb[0].mxu0 %v1190
    %v1467 = vpop.f32.mrb[0].mxu0
    %v1468 = vadd.f32 %v1223, %v1467
    %v1469 = vpop.f32.mrb[0].mxu0
    %v1470 = vpop.f32.mrb[0].mxu0
    %v1471 = vadd.f32 %v1223, %v1470
    %v1472 = vpop.f32.mrb[0].mxu0
    %1473 = vmatprep.mubr.bf16.mxu0 0
    %1474 = vmatmul.mubr.bf16.gmra.mrb[0].mxu0 %v1191
    %v1475 = vpop.f32.mrb[0].mxu0
    %v1476 = vadd.f32 %v1223, %v1475
    %v1477 = vpop.f32.mrb[0].mxu0
    %v1478 = vpop.f32.mrb[0].mxu0
    %v1479 = vadd.f32 %v1223, %v1478
    %v1480 = vpop.f32.mrb[0].mxu0
    %1481 = vmatprep.mubr.bf16.mxu0 0
    %1482 = vmatmul.mubr.bf16.gmra.mrb[0].mxu0 %v1192
    %v1483 = vpop.f32.mrb[0].mxu0
    %v1484 = vadd.f32 %v1223, %v1483
    %v1485 = vpop.f32.mrb[0].mxu0
    %v1486 = vpop.f32.mrb[0].mxu0
    %v1487 = vadd.f32 %v1223, %v1486
    %v1488 = vpop.f32.mrb[0].mxu0
    %1489 = vmatprep.mubr.bf16.mxu0 0
    %1490 = vmatmul.mubr.bf16.gmra.mrb[0].mxu0 %v1193
    %v1491 = vpop.f32.mrb[0].mxu0
    %v1492 = vadd.f32 %v1223, %v1491
    %v1493 = vpop.f32.mrb[0].mxu0
    %v1494 = vpop.f32.mrb[0].mxu0
    %v1495 = vadd.f32 %v1223, %v1494
    %v1496 = vpop.f32.mrb[0].mxu0
    %1497 = vmatprep.mubr.bf16.mxu0 0
    %1498 = vmatmul.mubr.bf16.gmra.mrb[0].mxu0 %v1194
    %v1499 = vpop.f32.mrb[0].mxu0
    %v1500 = vadd.f32 %v1223, %v1499
    %v1501 = vpop.f32.mrb[0].mxu0
    %v1502 = vpop.f32.mrb[0].mxu0
    %v1503 = vadd.f32 %v1223, %v1502
    %v1504 = vpop.f32.mrb[0].mxu0
    %1505 = vmatprep.mubr.bf16.mxu0 0
    %1506 = vmatmul.mubr.bf16.gmra.mrb[0].mxu0 %v1195
    %v1507 = vpop.f32.mrb[0].mxu0
    %v1508 = vadd.f32 %v1223, %v1507
    %v1509 = vpop.f32.mrb[0].mxu0
    %v1510 = vpop.f32.mrb[0].mxu0
    %v1511 = vadd.f32 %v1223, %v1510
    %v1512 = vpop.f32.mrb[0].mxu0
    %1513 = vmatprep.mubr.bf16.mxu0 0
    %1514 = vmatmul.mubr.bf16.gmra.mrb[0].mxu0 %v1196
    %v1515 = vpop.f32.mrb[0].mxu0
    %v1516 = vadd.f32 %v1223, %v1515
    %v1517 = vpop.f32.mrb[0].mxu0
    %v1518 = vpop.f32.mrb[0].mxu0
    %v1519 = vadd.f32 %v1223, %v1518
    %v1520 = vpop.f32.mrb[0].mxu0
    %1521 = vmatprep.mubr.bf16.mxu0 0
    %1522 = vmatmul.mubr.bf16.gmra.mrb[0].mxu0 %v1197
    %v1523 = vpop.f32.mrb[0].mxu0
    %v1524 = vadd.f32 %v1223, %v1523
    %v1525 = vpop.f32.mrb[0].mxu0
    %v1526 = vpop.f32.mrb[0].mxu0
    %v1527 = vadd.f32 %v1223, %v1526
    %v1528 = vpop.f32.mrb[0].mxu0
    %1529 = vmatprep.mubr.bf16.mxu0 0
    %1530 = vmatmul.mubr.bf16.gmra.mrb[0].mxu0 %v1198
    %v1531 = vpop.f32.mrb[0].mxu0
    %v1532 = vadd.f32 %v1223, %v1531
    %v1533 = vpop.f32.mrb[0].mxu0
    %v1534 = vpop.f32.mrb[0].mxu0
    %v1535 = vadd.f32 %v1223, %v1534
    %v1536 = vpop.f32.mrb[0].mxu0
    %1537 = vmatprep.mubr.bf16.mxu0 0
    %1538 = vmatmul.mubr.bf16.gmra.mrb[0].mxu0 %v1199
    %v1539 = vpop.f32.mrb[0].mxu0
    %v1540 = vadd.f32 %v1223, %v1539
    %v1541 = vpop.f32.mrb[0].mxu0
    %v1542 = vpop.f32.mrb[0].mxu0
    %v1543 = vadd.f32 %v1223, %v1542
    %v1544 = vpop.f32.mrb[0].mxu0
    %1545 = vmatprep.mubr.bf16.mxu0 0
    %1546 = vmatmul.mubr.bf16.gmra.mrb[0].mxu0 %v1200
    %v1547 = vpop.f32.mrb[0].mxu0
    %v1548 = vadd.f32 %v1223, %v1547
    %v1549 = vpop.f32.mrb[0].mxu0
    %v1550 = vpop.f32.mrb[0].mxu0
    %v1551 = vadd.f32 %v1223, %v1550
    %v1552 = vpop.f32.mrb[0].mxu0
    %1553 = vmatprep.mubr.bf16.mxu0 0
    %1554 = vmatmul.mubr.bf16.gmra.mrb[0].mxu0 %v1201
    %v1555 = vpop.f32.mrb[0].mxu0
    %v1556 = vadd.f32 %v1223, %v1555
    %v1557 = vpop.f32.mrb[0].mxu0
    %v1558 = vpop.f32.mrb[0].mxu0
    %v1559 = vadd.f32 %v1223, %v1558
    %v1560 = vpop.f32.mrb[0].mxu0
    %1561 = vdwg.mxu0
    %v1562 = vmax.f32 %v1308, 0.0
    %v1563 = vmax.f32 %v1311, 0.0
    %v1564 = vmax.f32 %v1316, 0.0
    %v1565 = vmax.f32 %v1319, 0.0
    %v1566 = vmax.f32 %v1324, 0.0
    %v1567 = vmax.f32 %v1327, 0.0
    %v1568 = vmax.f32 %v1332, 0.0
    %v1569 = vmax.f32 %v1335, 0.0
    %v1570 = vmax.f32 %v1340, 0.0
    %v1571 = vmax.f32 %v1343, 0.0
    %v1572 = vmax.f32 %v1348, 0.0
    %v1573 = vmax.f32 %v1351, 0.0
    %v1574 = vmax.f32 %v1356, 0.0
    %v1575 = vmax.f32 %v1359, 0.0
    %v1576 = vmax.f32 %v1364, 0.0
    %v1577 = vmax.f32 %v1367, 0.0
    %v1578 = vmax.f32 %v1372, 0.0
    %v1579 = vmax.f32 %v1375, 0.0
    %v1580 = vmax.f32 %v1380, 0.0
    %v1581 = vmax.f32 %v1383, 0.0
    %v1582 = vmax.f32 %v1388, 0.0
    %v1583 = vmax.f32 %v1391, 0.0
    %v1584 = vmax.f32 %v1396, 0.0
    %v1585 = vmax.f32 %v1399, 0.0
    %v1586 = vmax.f32 %v1404, 0.0
    %v1587 = vmax.f32 %v1407, 0.0
    %v1588 = vmax.f32 %v1412, 0.0
    %v1589 = vmax.f32 %v1415, 0.0
    %v1590 = vmax.f32 %v1420, 0.0
    %v1591 = vmax.f32 %v1423, 0.0
    %v1592 = vmax.f32 %v1428, 0.0
    %v1593 = vmax.f32 %v1431, 0.0
    %v1594 = vmax.f32 %v1436, 0.0
    %v1595 = vmax.f32 %v1439, 0.0
    %v1596 = vmax.f32 %v1444, 0.0
    %v1597 = vmax.f32 %v1447, 0.0
    %v1598 = vmax.f32 %v1452, 0.0
    %v1599 = vmax.f32 %v1455, 0.0
    %v1600 = vmax.f32 %v1460, 0.0
    %v1601 = vmax.f32 %v1463, 0.0
    %v1602 = vmax.f32 %v1468, 0.0
    %v1603 = vmax.f32 %v1471, 0.0
    %v1604 = vmax.f32 %v1476, 0.0
    %v1605 = vmax.f32 %v1479, 0.0
    %v1606 = vmax.f32 %v1484, 0.0
    %v1607 = vmax.f32 %v1487, 0.0
    %v1608 = vmax.f32 %v1492, 0.0
    %v1609 = vmax.f32 %v1495, 0.0
    %v1610 = vmax.f32 %v1500, 0.0
    %v1611 = vmax.f32 %v1503, 0.0
    %v1612 = vmax.f32 %v1508, 0.0
    %v1613 = vmax.f32 %v1511, 0.0
    %v1614 = vmax.f32 %v1516, 0.0
    %v1615 = vmax.f32 %v1519, 0.0
    %v1616 = vmax.f32 %v1524, 0.0
    %v1617 = vmax.f32 %v1527, 0.0
    %v1618 = vmax.f32 %v1532, 0.0
    %v1619 = vmax.f32 %v1535, 0.0
    %v1620 = vmax.f32 %v1540, 0.0
    %v1621 = vmax.f32 %v1543, 0.0
    %v1622 = vmax.f32 %v1548, 0.0
    %v1623 = vmax.f32 %v1551, 0.0
    %v1624 = vmax.f32 %v1556, 0.0
    %v1625 = vmax.f32 %v1559, 0.0
    %v1626 = vrot.slane %v1562, 4
    %v1627 = vmax.f32 %v1562, %v1626
    %v1628 = vrot.slane %v1627, 2
    %v1629 = vmax.f32 %v1627, %v1628
    %v1630 = vrot.slane %v1629, 1
    %v1631 = vmax.f32 %v1629, %v1630
    %v1632 = vrot.slane %v1563, 4
    %v1633 = vmax.f32 %v1563, %v1632
    %v1634 = vrot.slane %v1633, 2
    %v1635 = vmax.f32 %v1633, %v1634
    %v1636 = vrot.slane %v1635, 1
    %v1637 = vmax.f32 %v1635, %v1636
    %v1638 = vrot.slane %v1564, 4
    %v1639 = vmax.f32 %v1564, %v1638
    %v1640 = vrot.slane %v1639, 2
    %v1641 = vmax.f32 %v1639, %v1640
    %v1642 = vrot.slane %v1641, 1
    %v1643 = vmax.f32 %v1641, %v1642
    %v1644 = vrot.slane %v1565, 4
    %v1645 = vmax.f32 %v1565, %v1644
    %v1646 = vrot.slane %v1645, 2
    %v1647 = vmax.f32 %v1645, %v1646
    %v1648 = vrot.slane %v1647, 1
    %v1649 = vmax.f32 %v1647, %v1648
    %v1650 = vrot.slane %v1566, 4
    %v1651 = vmax.f32 %v1566, %v1650
    %v1652 = vrot.slane %v1651, 2
    %v1653 = vmax.f32 %v1651, %v1652
    %v1654 = vrot.slane %v1653, 1
    %v1655 = vmax.f32 %v1653, %v1654
    %v1656 = vrot.slane %v1567, 4
    %v1657 = vmax.f32 %v1567, %v1656
    %v1658 = vrot.slane %v1657, 2
    %v1659 = vmax.f32 %v1657, %v1658
    %v1660 = vrot.slane %v1659, 1
    %v1661 = vmax.f32 %v1659, %v1660
    %v1662 = vrot.slane %v1568, 4
    %v1663 = vmax.f32 %v1568, %v1662
    %v1664 = vrot.slane %v1663, 2
    %v1665 = vmax.f32 %v1663, %v1664
    %v1666 = vrot.slane %v1665, 1
    %v1667 = vmax.f32 %v1665, %v1666
    %v1668 = vrot.slane %v1569, 4
    %v1669 = vmax.f32 %v1569, %v1668
    %v1670 = vrot.slane %v1669, 2
    %v1671 = vmax.f32 %v1669, %v1670
    %v1672 = vrot.slane %v1671, 1
    %v1673 = vmax.f32 %v1671, %v1672
    %v1674 = vrot.slane %v1570, 4
    %v1675 = vmax.f32 %v1570, %v1674
    %v1676 = vrot.slane %v1675, 2
    %v1677 = vmax.f32 %v1675, %v1676
    %v1678 = vrot.slane %v1677, 1
    %v1679 = vmax.f32 %v1677, %v1678
    %v1680 = vrot.slane %v1571, 4
    %v1681 = vmax.f32 %v1571, %v1680
    %v1682 = vrot.slane %v1681, 2
    %v1683 = vmax.f32 %v1681, %v1682
    %v1684 = vrot.slane %v1683, 1
    %v1685 = vmax.f32 %v1683, %v1684
    %v1686 = vrot.slane %v1572, 4
    %v1687 = vmax.f32 %v1572, %v1686
    %v1688 = vrot.slane %v1687, 2
    %v1689 = vmax.f32 %v1687, %v1688
    %v1690 = vrot.slane %v1689, 1
    %v1691 = vmax.f32 %v1689, %v1690
    %v1692 = vrot.slane %v1573, 4
    %v1693 = vmax.f32 %v1573, %v1692
    %v1694 = vrot.slane %v1693, 2
    %v1695 = vmax.f32 %v1693, %v1694
    %v1696 = vrot.slane %v1695, 1
    %v1697 = vmax.f32 %v1695, %v1696
    %v1698 = vrot.slane %v1574, 4
    %v1699 = vmax.f32 %v1574, %v1698
    %v1700 = vrot.slane %v1699, 2
    %v1701 = vmax.f32 %v1699, %v1700
    %v1702 = vrot.slane %v1701, 1
    %v1703 = vmax.f32 %v1701, %v1702
    %v1704 = vrot.slane %v1575, 4
    %v1705 = vmax.f32 %v1575, %v1704
    %v1706 = vrot.slane %v1705, 2
    %v1707 = vmax.f32 %v1705, %v1706
    %v1708 = vrot.slane %v1707, 1
    %v1709 = vmax.f32 %v1707, %v1708
    %v1710 = vrot.slane %v1576, 4
    %v1711 = vmax.f32 %v1576, %v1710
    %v1712 = vrot.slane %v1711, 2
    %v1713 = vmax.f32 %v1711, %v1712
    %v1714 = vrot.slane %v1713, 1
    %v1715 = vmax.f32 %v1713, %v1714
    %v1716 = vrot.slane %v1577, 4
    %v1717 = vmax.f32 %v1577, %v1716
    %v1718 = vrot.slane %v1717, 2
    %v1719 = vmax.f32 %v1717, %v1718
    %v1720 = vrot.slane %v1719, 1
    %v1721 = vmax.f32 %v1719, %v1720
    %v1722 = vrot.slane %v1578, 4
    %v1723 = vmax.f32 %v1578, %v1722
    %v1724 = vrot.slane %v1723, 2
    %v1725 = vmax.f32 %v1723, %v1724
    %v1726 = vrot.slane %v1725, 1
    %v1727 = vmax.f32 %v1725, %v1726
    %v1728 = vrot.slane %v1579, 4
    %v1729 = vmax.f32 %v1579, %v1728
    %v1730 = vrot.slane %v1729, 2
    %v1731 = vmax.f32 %v1729, %v1730
    %v1732 = vrot.slane %v1731, 1
    %v1733 = vmax.f32 %v1731, %v1732
    %v1734 = vrot.slane %v1580, 4
    %v1735 = vmax.f32 %v1580, %v1734
    %v1736 = vrot.slane %v1735, 2
    %v1737 = vmax.f32 %v1735, %v1736
    %v1738 = vrot.slane %v1737, 1
    %v1739 = vmax.f32 %v1737, %v1738
    %v1740 = vrot.slane %v1581, 4
    %v1741 = vmax.f32 %v1581, %v1740
    %v1742 = vrot.slane %v1741, 2
    %v1743 = vmax.f32 %v1741, %v1742
    %v1744 = vrot.slane %v1743, 1
    %v1745 = vmax.f32 %v1743, %v1744
    %v1746 = vrot.slane %v1582, 4
    %v1747 = vmax.f32 %v1582, %v1746
    %v1748 = vrot.slane %v1747, 2
    %v1749 = vmax.f32 %v1747, %v1748
    %v1750 = vrot.slane %v1749, 1
    %v1751 = vmax.f32 %v1749, %v1750
    %v1752 = vrot.slane %v1583, 4
    %v1753 = vmax.f32 %v1583, %v1752
    %v1754 = vrot.slane %v1753, 2
    %v1755 = vmax.f32 %v1753, %v1754
    %v1756 = vrot.slane %v1755, 1
    %v1757 = vmax.f32 %v1755, %v1756
    %v1758 = vrot.slane %v1584, 4
    %v1759 = vmax.f32 %v1584, %v1758
    %v1760 = vrot.slane %v1759, 2
    %v1761 = vmax.f32 %v1759, %v1760
    %v1762 = vrot.slane %v1761, 1
    %v1763 = vmax.f32 %v1761, %v1762
    %v1764 = vrot.slane %v1585, 4
    %v1765 = vmax.f32 %v1585, %v1764
    %v1766 = vrot.slane %v1765, 2
    %v1767 = vmax.f32 %v1765, %v1766
    %v1768 = vrot.slane %v1767, 1
    %v1769 = vmax.f32 %v1767, %v1768
    %v1770 = vrot.slane %v1586, 4
    %v1771 = vmax.f32 %v1586, %v1770
    %v1772 = vrot.slane %v1771, 2
    %v1773 = vmax.f32 %v1771, %v1772
    %v1774 = vrot.slane %v1773, 1
    %v1775 = vmax.f32 %v1773, %v1774
    %v1776 = vrot.slane %v1587, 4
    %v1777 = vmax.f32 %v1587, %v1776
    %v1778 = vrot.slane %v1777, 2
    %v1779 = vmax.f32 %v1777, %v1778
    %v1780 = vrot.slane %v1779, 1
    %v1781 = vmax.f32 %v1779, %v1780
    %v1782 = vrot.slane %v1588, 4
    %v1783 = vmax.f32 %v1588, %v1782
    %v1784 = vrot.slane %v1783, 2
    %v1785 = vmax.f32 %v1783, %v1784
    %v1786 = vrot.slane %v1785, 1
    %v1787 = vmax.f32 %v1785, %v1786
    %v1788 = vrot.slane %v1589, 4
    %v1789 = vmax.f32 %v1589, %v1788
    %v1790 = vrot.slane %v1789, 2
    %v1791 = vmax.f32 %v1789, %v1790
    %v1792 = vrot.slane %v1791, 1
    %v1793 = vmax.f32 %v1791, %v1792
    %v1794 = vrot.slane %v1590, 4
    %v1795 = vmax.f32 %v1590, %v1794
    %v1796 = vrot.slane %v1795, 2
    %v1797 = vmax.f32 %v1795, %v1796
    %v1798 = vrot.slane %v1797, 1
    %v1799 = vmax.f32 %v1797, %v1798
    %v1800 = vrot.slane %v1591, 4
    %v1801 = vmax.f32 %v1591, %v1800
    %v1802 = vrot.slane %v1801, 2
    %v1803 = vmax.f32 %v1801, %v1802
    %v1804 = vrot.slane %v1803, 1
    %v1805 = vmax.f32 %v1803, %v1804
    %v1806 = vrot.slane %v1592, 4
    %v1807 = vmax.f32 %v1592, %v1806
    %v1808 = vrot.slane %v1807, 2
    %v1809 = vmax.f32 %v1807, %v1808
    %v1810 = vrot.slane %v1809, 1
    %v1811 = vmax.f32 %v1809, %v1810
    %v1812 = vrot.slane %v1593, 4
    %v1813 = vmax.f32 %v1593, %v1812
    %v1814 = vrot.slane %v1813, 2
    %v1815 = vmax.f32 %v1813, %v1814
    %v1816 = vrot.slane %v1815, 1
    %v1817 = vmax.f32 %v1815, %v1816
    %v1818 = vrot.slane %v1594, 4
    %v1819 = vmax.f32 %v1594, %v1818
    %v1820 = vrot.slane %v1819, 2
    %v1821 = vmax.f32 %v1819, %v1820
    %v1822 = vrot.slane %v1821, 1
    %v1823 = vmax.f32 %v1821, %v1822
    %v1824 = vrot.slane %v1595, 4
    %v1825 = vmax.f32 %v1595, %v1824
    %v1826 = vrot.slane %v1825, 2
    %v1827 = vmax.f32 %v1825, %v1826
    %v1828 = vrot.slane %v1827, 1
    %v1829 = vmax.f32 %v1827, %v1828
    %v1830 = vrot.slane %v1596, 4
    %v1831 = vmax.f32 %v1596, %v1830
    %v1832 = vrot.slane %v1831, 2
    %v1833 = vmax.f32 %v1831, %v1832
    %v1834 = vrot.slane %v1833, 1
    %v1835 = vmax.f32 %v1833, %v1834
    %v1836 = vrot.slane %v1597, 4
    %v1837 = vmax.f32 %v1597, %v1836
    %v1838 = vrot.slane %v1837, 2
    %v1839 = vmax.f32 %v1837, %v1838
    %v1840 = vrot.slane %v1839, 1
    %v1841 = vmax.f32 %v1839, %v1840
    %v1842 = vrot.slane %v1598, 4
    %v1843 = vmax.f32 %v1598, %v1842
    %v1844 = vrot.slane %v1843, 2
    %v1845 = vmax.f32 %v1843, %v1844
    %v1846 = vrot.slane %v1845, 1
    %v1847 = vmax.f32 %v1845, %v1846
    %v1848 = vrot.slane %v1599, 4
    %v1849 = vmax.f32 %v1599, %v1848
    %v1850 = vrot.slane %v1849, 2
    %v1851 = vmax.f32 %v1849, %v1850
    %v1852 = vrot.slane %v1851, 1
    %v1853 = vmax.f32 %v1851, %v1852
    %v1854 = vrot.slane %v1600, 4
    %v1855 = vmax.f32 %v1600, %v1854
    %v1856 = vrot.slane %v1855, 2
    %v1857 = vmax.f32 %v1855, %v1856
    %v1858 = vrot.slane %v1857, 1
    %v1859 = vmax.f32 %v1857, %v1858
    %v1860 = vrot.slane %v1601, 4
    %v1861 = vmax.f32 %v1601, %v1860
    %v1862 = vrot.slane %v1861, 2
    %v1863 = vmax.f32 %v1861, %v1862
    %v1864 = vrot.slane %v1863, 1
    %v1865 = vmax.f32 %v1863, %v1864
    %v1866 = vrot.slane %v1602, 4
    %v1867 = vmax.f32 %v1602, %v1866
    %v1868 = vrot.slane %v1867, 2
    %v1869 = vmax.f32 %v1867, %v1868
    %v1870 = vrot.slane %v1869, 1
    %v1871 = vmax.f32 %v1869, %v1870
    %v1872 = vrot.slane %v1603, 4
    %v1873 = vmax.f32 %v1603, %v1872
    %v1874 = vrot.slane %v1873, 2
    %v1875 = vmax.f32 %v1873, %v1874
    %v1876 = vrot.slane %v1875, 1
    %v1877 = vmax.f32 %v1875, %v1876
    %v1878 = vrot.slane %v1604, 4
    %v1879 = vmax.f32 %v1604, %v1878
    %v1880 = vrot.slane %v1879, 2
    %v1881 = vmax.f32 %v1879, %v1880
    %v1882 = vrot.slane %v1881, 1
    %v1883 = vmax.f32 %v1881, %v1882
    %v1884 = vrot.slane %v1605, 4
    %v1885 = vmax.f32 %v1605, %v1884
    %v1886 = vrot.slane %v1885, 2
    %v1887 = vmax.f32 %v1885, %v1886
    %v1888 = vrot.slane %v1887, 1
    %v1889 = vmax.f32 %v1887, %v1888
    %v1890 = vrot.slane %v1606, 4
    %v1891 = vmax.f32 %v1606, %v1890
    %v1892 = vrot.slane %v1891, 2
    %v1893 = vmax.f32 %v1891, %v1892
    %v1894 = vrot.slane %v1893, 1
    %v1895 = vmax.f32 %v1893, %v1894
    %v1896 = vrot.slane %v1607, 4
    %v1897 = vmax.f32 %v1607, %v1896
    %v1898 = vrot.slane %v1897, 2
    %v1899 = vmax.f32 %v1897, %v1898
    %v1900 = vrot.slane %v1899, 1
    %v1901 = vmax.f32 %v1899, %v1900
    %v1902 = vrot.slane %v1608, 4
    %v1903 = vmax.f32 %v1608, %v1902
    %v1904 = vrot.slane %v1903, 2
    %v1905 = vmax.f32 %v1903, %v1904
    %v1906 = vrot.slane %v1905, 1
    %v1907 = vmax.f32 %v1905, %v1906
    %v1908 = vrot.slane %v1609, 4
    %v1909 = vmax.f32 %v1609, %v1908
    %v1910 = vrot.slane %v1909, 2
    %v1911 = vmax.f32 %v1909, %v1910
    %v1912 = vrot.slane %v1911, 1
    %v1913 = vmax.f32 %v1911, %v1912
    %v1914 = vrot.slane %v1610, 4
    %v1915 = vmax.f32 %v1610, %v1914
    %v1916 = vrot.slane %v1915, 2
    %v1917 = vmax.f32 %v1915, %v1916
    %v1918 = vrot.slane %v1917, 1
    %v1919 = vmax.f32 %v1917, %v1918
    %v1920 = vrot.slane %v1611, 4
    %v1921 = vmax.f32 %v1611, %v1920
    %v1922 = vrot.slane %v1921, 2
    %v1923 = vmax.f32 %v1921, %v1922
    %v1924 = vrot.slane %v1923, 1
    %v1925 = vmax.f32 %v1923, %v1924
    %v1926 = vrot.slane %v1612, 4
    %v1927 = vmax.f32 %v1612, %v1926
    %v1928 = vrot.slane %v1927, 2
    %v1929 = vmax.f32 %v1927, %v1928
    %v1930 = vrot.slane %v1929, 1
    %v1931 = vmax.f32 %v1929, %v1930
    %v1932 = vrot.slane %v1613, 4
    %v1933 = vmax.f32 %v1613, %v1932
    %v1934 = vrot.slane %v1933, 2
    %v1935 = vmax.f32 %v1933, %v1934
    %v1936 = vrot.slane %v1935, 1
    %v1937 = vmax.f32 %v1935, %v1936
    %v1938 = vrot.slane %v1614, 4
    %v1939 = vmax.f32 %v1614, %v1938
    %v1940 = vrot.slane %v1939, 2
    %v1941 = vmax.f32 %v1939, %v1940
    %v1942 = vrot.slane %v1941, 1
    %v1943 = vmax.f32 %v1941, %v1942
    %v1944 = vrot.slane %v1615, 4
    %v1945 = vmax.f32 %v1615, %v1944
    %v1946 = vrot.slane %v1945, 2
    %v1947 = vmax.f32 %v1945, %v1946
    %v1948 = vrot.slane %v1947, 1
    %v1949 = vmax.f32 %v1947, %v1948
    %v1950 = vrot.slane %v1616, 4
    %v1951 = vmax.f32 %v1616, %v1950
    %v1952 = vrot.slane %v1951, 2
    %v1953 = vmax.f32 %v1951, %v1952
    %v1954 = vrot.slane %v1953, 1
    %v1955 = vmax.f32 %v1953, %v1954
    %v1956 = vrot.slane %v1617, 4
    %v1957 = vmax.f32 %v1617, %v1956
    %v1958 = vrot.slane %v1957, 2
    %v1959 = vmax.f32 %v1957, %v1958
    %v1960 = vrot.slane %v1959, 1
    %v1961 = vmax.f32 %v1959, %v1960
    %v1962 = vrot.slane %v1618, 4
    %v1963 = vmax.f32 %v1618, %v1962
    %v1964 = vrot.slane %v1963, 2
    %v1965 = vmax.f32 %v1963, %v1964
    %v1966 = vrot.slane %v1965, 1
    %v1967 = vmax.f32 %v1965, %v1966
    %v1968 = vrot.slane %v1619, 4
    %v1969 = vmax.f32 %v1619, %v1968
    %v1970 = vrot.slane %v1969, 2
    %v1971 = vmax.f32 %v1969, %v1970
    %v1972 = vrot.slane %v1971, 1
    %v1973 = vmax.f32 %v1971, %v1972
    %v1974 = vrot.slane %v1620, 4
    %v1975 = vmax.f32 %v1620, %v1974
    %v1976 = vrot.slane %v1975, 2
    %v1977 = vmax.f32 %v1975, %v1976
    %v1978 = vrot.slane %v1977, 1
    %v1979 = vmax.f32 %v1977, %v1978
    %v1980 = vrot.slane %v1621, 4
    %v1981 = vmax.f32 %v1621, %v1980
    %v1982 = vrot.slane %v1981, 2
    %v1983 = vmax.f32 %v1981, %v1982
    %v1984 = vrot.slane %v1983, 1
    %v1985 = vmax.f32 %v1983, %v1984
    %v1986 = vrot.slane %v1622, 4
    %v1987 = vmax.f32 %v1622, %v1986
    %v1988 = vrot.slane %v1987, 2
    %v1989 = vmax.f32 %v1987, %v1988
    %v1990 = vrot.slane %v1989, 1
    %v1991 = vmax.f32 %v1989, %v1990
    %v1992 = vrot.slane %v1623, 4
    %v1993 = vmax.f32 %v1623, %v1992
    %v1994 = vrot.slane %v1993, 2
    %v1995 = vmax.f32 %v1993, %v1994
    %v1996 = vrot.slane %v1995, 1
    %v1997 = vmax.f32 %v1995, %v1996
    %v1998 = vrot.slane %v1624, 4
    %v1999 = vmax.f32 %v1624, %v1998
    %v2000 = vrot.slane %v1999, 2
    %v2001 = vmax.f32 %v1999, %v2000
    %v2002 = vrot.slane %v2001, 1
    %v2003 = vmax.f32 %v2001, %v2002
    %v2004 = vrot.slane %v1625, 4
    %v2005 = vmax.f32 %v1625, %v2004
    %v2006 = vrot.slane %v2005, 2
    %v2007 = vmax.f32 %v2005, %v2006
    %v2008 = vrot.slane %v2007, 1
    %v2009 = vmax.f32 %v2007, %v2008
    %v2010 = vpack.c.bf16 %v1631, %v1631
    %v2011 = vpack.c.bf16 %v1637, %v1637
    %v2012 = vpack.c.bf16 %v1643, %v1643
    %v2013 = vpack.c.bf16 %v1649, %v1649
    %v2014 = vpack.c.bf16 %v1655, %v1655
    %v2015 = vpack.c.bf16 %v1661, %v1661
    %v2016 = vpack.c.bf16 %v1667, %v1667
    %v2017 = vpack.c.bf16 %v1673, %v1673
    %v2018 = vpack.c.bf16 %v1679, %v1679
    %v2019 = vpack.c.bf16 %v1685, %v1685
    %v2020 = vpack.c.bf16 %v1691, %v1691
    %v2021 = vpack.c.bf16 %v1697, %v1697
    %v2022 = vpack.c.bf16 %v1703, %v1703
    %v2023 = vpack.c.bf16 %v1709, %v1709
    %v2024 = vpack.c.bf16 %v1715, %v1715
    %v2025 = vpack.c.bf16 %v1721, %v1721
    %v2026 = vpack.c.bf16 %v1727, %v1727
    %v2027 = vpack.c.bf16 %v1733, %v1733
    %v2028 = vpack.c.bf16 %v1739, %v1739
    %v2029 = vpack.c.bf16 %v1745, %v1745
    %v2030 = vpack.c.bf16 %v1751, %v1751
    %v2031 = vpack.c.bf16 %v1757, %v1757
    %v2032 = vpack.c.bf16 %v1763, %v1763
    %v2033 = vpack.c.bf16 %v1769, %v1769
    %v2034 = vpack.c.bf16 %v1775, %v1775
    %v2035 = vpack.c.bf16 %v1781, %v1781
    %v2036 = vpack.c.bf16 %v1787, %v1787
    %v2037 = vpack.c.bf16 %v1793, %v1793
    %v2038 = vpack.c.bf16 %v1799, %v1799
    %v2039 = vpack.c.bf16 %v1805, %v1805
    %v2040 = vpack.c.bf16 %v1811, %v1811
    %v2041 = vpack.c.bf16 %v1817, %v1817
    %v2042 = vpack.c.bf16 %v1823, %v1823
    %v2043 = vpack.c.bf16 %v1829, %v1829
    %v2044 = vpack.c.bf16 %v1835, %v1835
    %v2045 = vpack.c.bf16 %v1841, %v1841
    %v2046 = vpack.c.bf16 %v1847, %v1847
    %v2047 = vpack.c.bf16 %v1853, %v1853
    %v2048 = vpack.c.bf16 %v1859, %v1859
    %v2049 = vpack.c.bf16 %v1865, %v1865
    %v2050 = vpack.c.bf16 %v1871, %v1871
    %v2051 = vpack.c.bf16 %v1877, %v1877
    %v2052 = vpack.c.bf16 %v1883, %v1883
    %v2053 = vpack.c.bf16 %v1889, %v1889
    %v2054 = vpack.c.bf16 %v1895, %v1895
    %v2055 = vpack.c.bf16 %v1901, %v1901
    %v2056 = vpack.c.bf16 %v1907, %v1907
    %v2057 = vpack.c.bf16 %v1913, %v1913
    %v2058 = vpack.c.bf16 %v1919, %v1919
    %v2059 = vpack.c.bf16 %v1925, %v1925
    %v2060 = vpack.c.bf16 %v1931, %v1931
    %v2061 = vpack.c.bf16 %v1937, %v1937
    %v2062 = vpack.c.bf16 %v1943, %v1943
    %v2063 = vpack.c.bf16 %v1949, %v1949
    %v2064 = vpack.c.bf16 %v1955, %v1955
    %v2065 = vpack.c.bf16 %v1961, %v1961
    %v2066 = vpack.c.bf16 %v1967, %v1967
    %v2067 = vpack.c.bf16 %v1973, %v1973
    %v2068 = vpack.c.bf16 %v1979, %v1979
    %v2069 = vpack.c.bf16 %v1985, %v1985
    %v2070 = vpack.c.bf16 %v1991, %v1991
    %v2071 = vpack.c.bf16 %v1997, %v1997
    %v2072 = vpack.c.bf16 %v2003, %v2003
    %v2073 = vpack.c.bf16 %v2009, %v2009
    %v2138 = vunpack.c.l.b16 %v2010
    %v2139 = vunpack.c.l.b16 %v2011
    %v2140 = vunpack.c.l.b16 %v2012
    %v2141 = vunpack.c.l.b16 %v2013
    %v2142 = vunpack.c.l.b16 %v2014
    %v2143 = vunpack.c.l.b16 %v2015
    %v2144 = vunpack.c.l.b16 %v2016
    %v2145 = vunpack.c.l.b16 %v2017
    %v2146 = vunpack.c.l.b16 %v2018
    %v2147 = vunpack.c.l.b16 %v2019
    %v2148 = vunpack.c.l.b16 %v2020
    %v2149 = vunpack.c.l.b16 %v2021
    %v2150 = vunpack.c.l.b16 %v2022
    %v2151 = vunpack.c.l.b16 %v2023
    %v2152 = vunpack.c.l.b16 %v2024
    %v2153 = vunpack.c.l.b16 %v2025
    %v2154 = vunpack.c.l.b16 %v2026
    %v2155 = vunpack.c.l.b16 %v2027
    %v2156 = vunpack.c.l.b16 %v2028
    %v2157 = vunpack.c.l.b16 %v2029
    %v2158 = vunpack.c.l.b16 %v2030
    %v2159 = vunpack.c.l.b16 %v2031
    %v2160 = vunpack.c.l.b16 %v2032
    %v2161 = vunpack.c.l.b16 %v2033
    %v2162 = vunpack.c.l.b16 %v2034
    %v2163 = vunpack.c.l.b16 %v2035
    %v2164 = vunpack.c.l.b16 %v2036
    %v2165 = vunpack.c.l.b16 %v2037
    %v2166 = vunpack.c.l.b16 %v2038
    %v2167 = vunpack.c.l.b16 %v2039
    %v2168 = vunpack.c.l.b16 %v2040
    %v2169 = vunpack.c.l.b16 %v2041
    %v2170 = vunpack.c.l.b16 %v2042
    %v2171 = vunpack.c.l.b16 %v2043
    %v2172 = vunpack.c.l.b16 %v2044
    %v2173 = vunpack.c.l.b16 %v2045
    %v2174 = vunpack.c.l.b16 %v2046
    %v2175 = vunpack.c.l.b16 %v2047
    %v2176 = vunpack.c.l.b16 %v2048
    %v2177 = vunpack.c.l.b16 %v2049
    %v2178 = vunpack.c.l.b16 %v2050
    %v2179 = vunpack.c.l.b16 %v2051
    %v2180 = vunpack.c.l.b16 %v2052
    %v2181 = vunpack.c.l.b16 %v2053
    %v2182 = vunpack.c.l.b16 %v2054
    %v2183 = vunpack.c.l.b16 %v2055
    %v2184 = vunpack.c.l.b16 %v2056
    %v2185 = vunpack.c.l.b16 %v2057
    %v2186 = vunpack.c.l.b16 %v2058
    %v2187 = vunpack.c.l.b16 %v2059
    %v2188 = vunpack.c.l.b16 %v2060
    %v2189 = vunpack.c.l.b16 %v2061
    %v2190 = vunpack.c.l.b16 %v2062
    %v2191 = vunpack.c.l.b16 %v2063
    %v2192 = vunpack.c.l.b16 %v2064
    %v2193 = vunpack.c.l.b16 %v2065
    %v2194 = vunpack.c.l.b16 %v2066
    %v2195 = vunpack.c.l.b16 %v2067
    %v2196 = vunpack.c.l.b16 %v2068
    %v2197 = vunpack.c.l.b16 %v2069
    %v2198 = vunpack.c.l.b16 %v2070
    %v2199 = vunpack.c.l.b16 %v2071
    %v2200 = vunpack.c.l.b16 %v2072
    %v2201 = vunpack.c.l.b16 %v2073
    %v2202 = vpack.c.b16 %v2138, %v2138
    %v2203 = vpack.c.b16 %v2139, %v2139
    %v2204 = vpack.c.b16 %v2140, %v2140
    %v2205 = vpack.c.b16 %v2141, %v2141
    %v2206 = vpack.c.b16 %v2142, %v2142
    %v2207 = vpack.c.b16 %v2143, %v2143
    %v2208 = vpack.c.b16 %v2144, %v2144
    %v2209 = vpack.c.b16 %v2145, %v2145
    %v2210 = vpack.c.b16 %v2146, %v2146
    %v2211 = vpack.c.b16 %v2147, %v2147
    %v2212 = vpack.c.b16 %v2148, %v2148
    %v2213 = vpack.c.b16 %v2149, %v2149
    %v2214 = vpack.c.b16 %v2150, %v2150
    %v2215 = vpack.c.b16 %v2151, %v2151
    %v2216 = vpack.c.b16 %v2152, %v2152
    %v2217 = vpack.c.b16 %v2153, %v2153
    %v2218 = vpack.c.b16 %v2154, %v2154
    %v2219 = vpack.c.b16 %v2155, %v2155
    %v2220 = vpack.c.b16 %v2156, %v2156
    %v2221 = vpack.c.b16 %v2157, %v2157
    %v2222 = vpack.c.b16 %v2158, %v2158
    %v2223 = vpack.c.b16 %v2159, %v2159
    %v2224 = vpack.c.b16 %v2160, %v2160
    %v2225 = vpack.c.b16 %v2161, %v2161
    %v2226 = vpack.c.b16 %v2162, %v2162
    %v2227 = vpack.c.b16 %v2163, %v2163
    %v2228 = vpack.c.b16 %v2164, %v2164
    %v2229 = vpack.c.b16 %v2165, %v2165
    %v2230 = vpack.c.b16 %v2166, %v2166
    %v2231 = vpack.c.b16 %v2167, %v2167
    %v2232 = vpack.c.b16 %v2168, %v2168
    %v2233 = vpack.c.b16 %v2169, %v2169
    %v2234 = vpack.c.b16 %v2170, %v2170
    %v2235 = vpack.c.b16 %v2171, %v2171
    %v2236 = vpack.c.b16 %v2172, %v2172
    %v2237 = vpack.c.b16 %v2173, %v2173
    %v2238 = vpack.c.b16 %v2174, %v2174
    %v2239 = vpack.c.b16 %v2175, %v2175
    %v2240 = vpack.c.b16 %v2176, %v2176
    %v2241 = vpack.c.b16 %v2177, %v2177
    %v2242 = vpack.c.b16 %v2178, %v2178
    %v2243 = vpack.c.b16 %v2179, %v2179
    %v2244 = vpack.c.b16 %v2180, %v2180
    %v2245 = vpack.c.b16 %v2181, %v2181
    %v2246 = vpack.c.b16 %v2182, %v2182
    %v2247 = vpack.c.b16 %v2183, %v2183
    %v2248 = vpack.c.b16 %v2184, %v2184
    %v2249 = vpack.c.b16 %v2185, %v2185
    %v2250 = vpack.c.b16 %v2186, %v2186
    %v2251 = vpack.c.b16 %v2187, %v2187
    %v2252 = vpack.c.b16 %v2188, %v2188
    %v2253 = vpack.c.b16 %v2189, %v2189
    %v2254 = vpack.c.b16 %v2190, %v2190
    %v2255 = vpack.c.b16 %v2191, %v2191
    %v2256 = vpack.c.b16 %v2192, %v2192
    %v2257 = vpack.c.b16 %v2193, %v2193
    %v2258 = vpack.c.b16 %v2194, %v2194
    %v2259 = vpack.c.b16 %v2195, %v2195
    %v2260 = vpack.c.b16 %v2196, %v2196
    %v2261 = vpack.c.b16 %v2197, %v2197
    %v2262 = vpack.c.b16 %v2198, %v2198
    %v2263 = vpack.c.b16 %v2199, %v2199
    %v2264 = vpack.c.b16 %v2200, %v2200
    %v2265 = vpack.c.b16 %v2201, %v2201
    %v2266 = vunpack.c.l.b16 %v2202
    %v2267 = vunpack.c.l.b16 %v2203
    %v2268 = vunpack.c.l.b16 %v2204
    %v2269 = vunpack.c.l.b16 %v2205
    %v2270 = vunpack.c.l.b16 %v2206
    %v2271 = vunpack.c.l.b16 %v2207
    %v2272 = vunpack.c.l.b16 %v2208
    %v2273 = vunpack.c.l.b16 %v2209
    %v2274 = vunpack.c.l.b16 %v2210
    %v2275 = vunpack.c.l.b16 %v2211
    %v2276 = vunpack.c.l.b16 %v2212
    %v2277 = vunpack.c.l.b16 %v2213
    %v2278 = vunpack.c.l.b16 %v2214
    %v2279 = vunpack.c.l.b16 %v2215
    %v2280 = vunpack.c.l.b16 %v2216
    %v2281 = vunpack.c.l.b16 %v2217
    %v2282 = vunpack.c.l.b16 %v2218
    %v2283 = vunpack.c.l.b16 %v2219
    %v2284 = vunpack.c.l.b16 %v2220
    %v2285 = vunpack.c.l.b16 %v2221
    %v2286 = vunpack.c.l.b16 %v2222
    %v2287 = vunpack.c.l.b16 %v2223
    %v2288 = vunpack.c.l.b16 %v2224
    %v2289 = vunpack.c.l.b16 %v2225
    %v2290 = vunpack.c.l.b16 %v2226
    %v2291 = vunpack.c.l.b16 %v2227
    %v2292 = vunpack.c.l.b16 %v2228
    %v2293 = vunpack.c.l.b16 %v2229
    %v2294 = vunpack.c.l.b16 %v2230
    %v2295 = vunpack.c.l.b16 %v2231
    %v2296 = vunpack.c.l.b16 %v2232
    %v2297 = vunpack.c.l.b16 %v2233
    %v2298 = vunpack.c.l.b16 %v2234
    %v2299 = vunpack.c.l.b16 %v2235
    %v2300 = vunpack.c.l.b16 %v2236
    %v2301 = vunpack.c.l.b16 %v2237
    %v2302 = vunpack.c.l.b16 %v2238
    %v2303 = vunpack.c.l.b16 %v2239
    %v2304 = vunpack.c.l.b16 %v2240
    %v2305 = vunpack.c.l.b16 %v2241
    %v2306 = vunpack.c.l.b16 %v2242
    %v2307 = vunpack.c.l.b16 %v2243
    %v2308 = vunpack.c.l.b16 %v2244
    %v2309 = vunpack.c.l.b16 %v2245
    %v2310 = vunpack.c.l.b16 %v2246
    %v2311 = vunpack.c.l.b16 %v2247
    %v2312 = vunpack.c.l.b16 %v2248
    %v2313 = vunpack.c.l.b16 %v2249
    %v2314 = vunpack.c.l.b16 %v2250
    %v2315 = vunpack.c.l.b16 %v2251
    %v2316 = vunpack.c.l.b16 %v2252
    %v2317 = vunpack.c.l.b16 %v2253
    %v2318 = vunpack.c.l.b16 %v2254
    %v2319 = vunpack.c.l.b16 %v2255
    %v2320 = vunpack.c.l.b16 %v2256
    %v2321 = vunpack.c.l.b16 %v2257
    %v2322 = vunpack.c.l.b16 %v2258
    %v2323 = vunpack.c.l.b16 %v2259
    %v2324 = vunpack.c.l.b16 %v2260
    %v2325 = vunpack.c.l.b16 %v2261
    %v2326 = vunpack.c.l.b16 %v2262
    %v2327 = vunpack.c.l.b16 %v2263
    %v2328 = vunpack.c.l.b16 %v2264
    %v2329 = vunpack.c.l.b16 %v2265
    %vm2330 = vcmask 1041409
    %v2331 = vsel %vm2330, %v2267, %v2266
    %vm2332 = vcmask 1042434
    %v2333 = vsel %vm2332, %v2268, %v2331
    %vm2334 = vcmask 1043459
    %v2335 = vsel %vm2334, %v2269, %v2333
    %vm2336 = vcmask 1044484
    %v2337 = vsel %vm2336, %v2270, %v2335
    %vm2338 = vcmask 1045509
    %v2339 = vsel %vm2338, %v2271, %v2337
    %vm2340 = vcmask 1046534
    %v2341 = vsel %vm2340, %v2272, %v2339
    %vm2342 = vcmask 1047559
    %v2343 = vsel %vm2342, %v2273, %v2341
    %v2344 = vsel %vm2330, %v2275, %v2274
    %v2345 = vsel %vm2332, %v2276, %v2344
    %v2346 = vsel %vm2334, %v2277, %v2345
    %v2347 = vsel %vm2336, %v2278, %v2346
    %v2348 = vsel %vm2338, %v2279, %v2347
    %v2349 = vsel %vm2340, %v2280, %v2348
    %v2350 = vsel %vm2342, %v2281, %v2349
    %v2351 = vsel %vm2330, %v2283, %v2282
    %v2352 = vsel %vm2332, %v2284, %v2351
    %v2353 = vsel %vm2334, %v2285, %v2352
    %v2354 = vsel %vm2336, %v2286, %v2353
    %v2355 = vsel %vm2338, %v2287, %v2354
    %v2356 = vsel %vm2340, %v2288, %v2355
    %v2357 = vsel %vm2342, %v2289, %v2356
    %v2358 = vsel %vm2330, %v2291, %v2290
    %v2359 = vsel %vm2332, %v2292, %v2358
    %v2360 = vsel %vm2334, %v2293, %v2359
    %v2361 = vsel %vm2336, %v2294, %v2360
    %v2362 = vsel %vm2338, %v2295, %v2361
    %v2363 = vsel %vm2340, %v2296, %v2362
    %v2364 = vsel %vm2342, %v2297, %v2363
    %v2365 = vsel %vm2330, %v2299, %v2298
    %v2366 = vsel %vm2332, %v2300, %v2365
    %v2367 = vsel %vm2334, %v2301, %v2366
    %v2368 = vsel %vm2336, %v2302, %v2367
    %v2369 = vsel %vm2338, %v2303, %v2368
    %v2370 = vsel %vm2340, %v2304, %v2369
    %v2371 = vsel %vm2342, %v2305, %v2370
    %v2372 = vsel %vm2330, %v2307, %v2306
    %v2373 = vsel %vm2332, %v2308, %v2372
    %v2374 = vsel %vm2334, %v2309, %v2373
    %v2375 = vsel %vm2336, %v2310, %v2374
    %v2376 = vsel %vm2338, %v2311, %v2375
    %v2377 = vsel %vm2340, %v2312, %v2376
    %v2378 = vsel %vm2342, %v2313, %v2377
    %v2379 = vsel %vm2330, %v2315, %v2314
    %v2380 = vsel %vm2332, %v2316, %v2379
    %v2381 = vsel %vm2334, %v2317, %v2380
    %v2382 = vsel %vm2336, %v2318, %v2381
    %v2383 = vsel %vm2338, %v2319, %v2382
    %v2384 = vsel %vm2340, %v2320, %v2383
    %v2385 = vsel %vm2342, %v2321, %v2384
    %v2386 = vsel %vm2330, %v2323, %v2322
    %v2387 = vsel %vm2332, %v2324, %v2386
    %v2388 = vsel %vm2334, %v2325, %v2387
    %v2389 = vsel %vm2336, %v2326, %v2388
    %v2390 = vsel %vm2338, %v2327, %v2389
    %v2391 = vsel %vm2340, %v2328, %v2390
    %v2392 = vsel %vm2342, %v2329, %v2391
    %v2393 = vpack.c.b16 %v2343, %v2343
    %v2394 = vpack.c.b16 %v2350, %v2350
    %v2395 = vpack.c.b16 %v2357, %v2357
    %v2396 = vpack.c.b16 %v2364, %v2364
    %v2397 = vpack.c.b16 %v2371, %v2371
    %v2398 = vpack.c.b16 %v2378, %v2378
    %v2399 = vpack.c.b16 %v2385, %v2385
    %v2400 = vpack.c.b16 %v2392, %v2392
    %2409 = vst [vmem:[#allocation2] sm:$0xf] %v2393
    %2410 = vst [vmem:[#allocation2 + $0x4] sm:$0xf] %v2394
    %2411 = vst [vmem:[#allocation2 + $0x8] sm:$0xf] %v2395
    %2412 = vst [vmem:[#allocation2 + $0xc] sm:$0xf] %v2396
    %2413 = vst [vmem:[#allocation2 + $0x10] sm:$0xf] %v2397
    %2414 = vst [vmem:[#allocation2 + $0x14] sm:$0xf] %v2398
    %2415 = vst [vmem:[#allocation2 + $0x18] sm:$0xf] %v2399
    %2416 = vst [vmem:[#allocation2 + $0x1c] sm:$0xf] %v2400
    // Predicated region
    $region30: #{tpu_custom_call.1} parent=1 // pred_check
      _
    $region31: #{tpu_custom_call.1} parent=1 // pred_check_branch
      %2418 = sbr.rel (0) target = $region33
    $region32: #{tpu_custom_call.1} parent=1 // pred_region
      %s2420 = ssub.s32 512, 512
      %2421 = vsyncadd [#allocation3], %s2420
      %s2422 = sshll.u32 [#allocation2], 4
      %s2423 = int_to_ptr.vmem [resolvable:$true] %s2422
      %2428 = dma.vmem_to_hbm [thread:$0]  %s2423, 512, %s7, [#allocation3], 64, 64, 4
    $region33: #{tpu_custom_call.1} parent=1 // pred_fallthru
      _
    // Predicated region
    $region34: #{tpu_custom_call.1} parent=1 // pred_check
      _
    $region35: #{tpu_custom_call.1} parent=1 // pred_check_branch
      %2430 = sbr.rel (0) target = $region37
    $region36: #{tpu_custom_call.1} parent=1 // pred_region
      %2431 = dma.done [#allocation3], 512
    $region37: #{tpu_custom_call.1} parent=1 // pred_fallthru
      _
    %2432 = vsyncpa [#allocation3], 1

</llo_original>
